<compile_context>
chip_gen: v7x
topology: tpu7x:2x2x1
jax: 0.10.0
libtpu: 0.0.40
codegen_flags: <defaults>
</compile_context>

<pallas_src>
import functools

import numpy as np
import jax
import jax.numpy as jnp
from jax.experimental import pallas as pl
from jax.experimental.pallas import tpu as pltpu


LAYER_DIMS = [(24, 240), (240, 200), (200, 140), (140, 100),
              (100, 60), (60, 45), (45, 30), (30, 3)]
KEEP_COLS = list(range(19)) + [21, 24]           # 21 pass-through columns
N_FEATURES = 27                                  # raw input feature count
N_LAYERS = len(LAYER_DIMS)


# ----------------------------- Pallas kernel --------------------------------
def _make_kernel(bf16_epilogue):
    def kernel(x_ref, *refs):
        # refs = (w1, b1, w2, b2, ..., w8, b8, s8, t8, o_ref)
        *wb, s8_ref, t8_ref, o_ref = refs

        h = x_ref[...].astype(jnp.bfloat16)      # (TB, 27) -> bf16 for MXU

        # Layer 1 (folded V-assembly + BN1-into-W2 handled at fold time).
        z = jnp.dot(h, wb[0][...], preferred_element_type=jnp.float32)
        h = jnp.maximum(z + wb[1][...], 0.0).astype(jnp.bfloat16)

        # Hidden layers 2..7: bf16 MXU, f32 accumulate, bf16/f32 epilogue.
        for li in range(1, N_LAYERS - 1):        # unrolled at trace time
            w_ref, b_ref = wb[2 * li], wb[2 * li + 1]
            z = jnp.dot(h, w_ref[...], preferred_element_type=jnp.float32)
            if bf16_epilogue:
                # bf16 VALU (v6e/v7x): halves elementwise + spill traffic.
                h = jnp.maximum(z.astype(jnp.bfloat16) + b_ref[...], 0)
            else:
                h = jnp.maximum(z + b_ref[...], 0.0).astype(jnp.bfloat16)

        # Output layer + ReLU + batch8 eval affine (f32; only 3 lanes).
        z = jnp.dot(h, wb[-2][...], preferred_element_type=jnp.float32) + wb[-1][...]
        o_ref[...] = jnp.maximum(z, 0.0) * s8_ref[...] + t8_ref[...]

    return kernel


# ----------------------------- Tiling helpers --------------------------------
def _round_up(n, m):
    return ((n + m - 1) // m) * m


def _choose_tb(B, target_tb=4096, split_threshold=1024):
    """Batch tile: multiple of 8; even #grid-steps for megacore on large B."""
    if B <= split_threshold:
        return B                                  # single step; overhead-bound anyway
    n_steps = max(2, pl.cdiv(B, target_tb))
    if n_steps % 2:
        n_steps += 1                              # even step count -> 2 TCs share evenly
    return min(_round_up(pl.cdiv(B, n_steps), 8), B)


def _vmem_limit_bytes(TB):
    lane = 128                                    # x/out lane-padded 27,3 -> 128
    const = 2 << 20                               # weights/biases/affines (generous)
    io = 2 * (2 * TB * lane * 4)                  # x + out, double-buffered f32
    act = 2 * TB * 256 * (4 + 2)                  # f32 z + bf16 h at widest padded layer
    return int(min(max(const + io + act, 32 << 20), 96 << 20))


# ----------------------------- Wrapper ---------------------------------------
def mlp8_pallas(x, folded, *, bf16_epilogue=True, target_tb=4096,
                single_buffer_consts=False):
    B, F = x.shape
    TB = _choose_tb(B, target_tb)
    grid = (pl.cdiv(B, TB),)

    const_mode = pl.Buffered(1) if single_buffer_consts else None

    def const_spec(shape):
        if const_mode is None:
            return pl.BlockSpec(shape, lambda i: (0, 0))
        return pl.BlockSpec(shape, lambda i: (0, 0), pipeline_mode=const_mode)

    in_specs = [pl.BlockSpec((TB, F), lambda i: (i, 0))]
    args = [x]
    for li, (w, b) in enumerate(zip(folded["weights"], folded["biases"])):
        if bf16_epilogue and 0 < li < N_LAYERS - 1:
            b = b.astype(jnp.bfloat16)            # hidden bias joins bf16 epilogue
        in_specs += [const_spec(w.shape), const_spec(b.shape)]
        args += [w, b]
    in_specs += [const_spec(folded["s8"].shape), const_spec(folded["t8"].shape)]
    args += [folded["s8"], folded["t8"]]

    # Advisory cost estimate (review item): lets XLA overlap surrounding graph.
    flops = 2 * B * sum(din * dout for din, dout in LAYER_DIMS) + 10 * B * 3
    param_bytes = sum(int(np.prod(a.shape)) * a.dtype.itemsize for a in args[1:])
    bytes_accessed = B * (F * 4 + 3 * 4) + param_bytes

    return pl.pallas_call(
        _make_kernel(bf16_epilogue),
        out_shape=jax.ShapeDtypeStruct((B, 3), jnp.float32),
        grid=grid,
        in_specs=in_specs,
        out_specs=pl.BlockSpec((TB, 3), lambda i: (i, 0)),
        compiler_params=pltpu.CompilerParams(
            dimension_semantics=("parallel",),      # megacore sharding on v7x
            vmem_limit_bytes=_vmem_limit_bytes(TB)),
        cost_estimate=pl.CostEstimate(flops=flops, transcendentals=0,
                                      bytes_accessed=bytes_accessed),
    )(*args)


@functools.partial(jax.jit, static_argnames=("bf16_epilogue",))
def mlp8_forward(x, folded, *, bf16_epilogue=True):
    # TODO(synk): at very small B the call is pure launch overhead; batch several
    # forwards into one call (stack along B) at the call site for latency wins.
    return mlp8_pallas(x, folded, bf16_epilogue=bf16_epilogue)


# ----------------------------- Parameters -----------------------------------
def init_params(key):
    keys = jax.random.split(key, 5 + 2 * N_LAYERS)
    p = {}
    for i, n in enumerate(["ASC_TRAIN", "ASC_SM", "ASC_CAR", "B_TIME", "B_COST"]):
        p[n] = jax.random.uniform(keys[i], (1,), jnp.float32)   # torch.rand

    for li, (din, dout) in enumerate(LAYER_DIMS):
        lim = 1.0 / np.sqrt(din)
        # torch Linear weight is (dout, din); store transposed (din, dout)
        p[f"w{li+1}"] = jax.random.uniform(keys[5 + 2 * li], (din, dout),
                                           jnp.float32, -lim, lim)
        p[f"b{li+1}"] = jax.random.uniform(keys[6 + 2 * li], (1, dout),
                                           jnp.float32, -lim, lim)

    # BatchNorm1d defaults: gamma=1, beta=0, running_mean=0, running_var=1
    eps = 1e-5
    for li, (_, dout) in enumerate(LAYER_DIMS):
        gamma = jnp.ones((1, dout), jnp.float32)
        beta = jnp.zeros((1, dout), jnp.float32)
        mean = jnp.zeros((1, dout), jnp.float32)
        var = jnp.ones((1, dout), jnp.float32)
        scale = gamma / jnp.sqrt(var + eps)
        shift = beta - mean * scale
        p[f"bn{li+1}_scale"] = scale
        p[f"bn{li+1}_shift"] = shift
    return p


def fold_params(p):
    """Fold V-assembly into W1/b1 and BatchNorms 1..7 into the next Linear."""
    # V = x @ P + c  (x: (B,27), V: (B,24))
    rows = jnp.array(KEEP_COLS + [19, 20, 22, 23, 25, 26], jnp.int32)
    cols = jnp.array(list(range(21)) + [21, 21, 22, 22, 23, 23], jnp.int32)
    bt, bc = p["B_TIME"][0], p["B_COST"][0]
    vals = jnp.concatenate([jnp.ones((21,), jnp.float32),
                            jnp.stack([bt, bc, bt, bc, bt, bc])])
    P = jnp.zeros((N_FEATURES, 24), jnp.float32).at[rows, cols].set(vals)
    c = (jnp.zeros((1, 24), jnp.float32)
         .at[0, 21].set(p["ASC_TRAIN"][0])
         .at[0, 22].set(p["ASC_SM"][0])
         .at[0, 23].set(p["ASC_CAR"][0]))

    W = [p[f"w{i+1}"] for i in range(N_LAYERS)]
    Bb = [p[f"b{i+1}"] for i in range(N_LAYERS)]

    # fold the affine V-assembly into the first Linear (in f32)
    Bb[0] = c @ W[0] + Bb[0]
    W[0] = P @ W[0]

    # fold BN_i (post-ReLU eval affine) into Linear_{i+1}, i = 1..7 (in f32)
    for i in range(7):
        s = p[f"bn{i+1}_scale"]          # (1, d_i)
        t = p[f"bn{i+1}_shift"]          # (1, d_i)
        w_next = W[i + 1]                # (d_i, d_{i+1})
        Bb[i + 1] = t @ w_next + Bb[i + 1]
        W[i + 1] = s.reshape(-1, 1) * w_next

    return {
        "weights": [w.astype(jnp.bfloat16) for w in W],   # bf16 MXU operands
        "biases": [b.astype(jnp.float32) for b in Bb],    # f32 master biases
        "s8": p["bn8_scale"].astype(jnp.float32),
        "t8": p["bn8_shift"].astype(jnp.float32),
    }


# --------------------------- References ---------------------------------------
def folded_reference(x, folded, bf16_epilogue=True):
    """Pure-JAX mirror of the exact kernel math."""
    ws, bs = folded["weights"], folded["biases"]
    h = x.astype(jnp.bfloat16)
    z = jnp.dot(h, ws[0], preferred_element_type=jnp.float32)
    h = jnp.maximum(z + bs[0], 0.0).astype(jnp.bfloat16)
    for li in range(1, N_LAYERS - 1):
        z = jnp.dot(h, ws[li], preferred_element_type=jnp.float32)
        if bf16_epilogue:
            h = jnp.maximum(z.astype(jnp.bfloat16) + bs[li].astype(jnp.bfloat16), 0)
        else:
            h = jnp.maximum(z + bs[li], 0.0).astype(jnp.bfloat16)
    z = jnp.dot(h, ws[-1], preferred_element_type=jnp.float32) + bs[-1]
    return jnp.maximum(z, 0.0) * folded["s8"] + folded["t8"]


def spec_reference(x, p):
    """f32 eval-mode replica of the original PyTorch forward (unfolded)."""
    V1 = p["ASC_TRAIN"] + p["B_TIME"] * x[:, 19] + p["B_COST"] * x[:, 20]
    V2 = p["ASC_SM"] + p["B_TIME"] * x[:, 22] + p["B_COST"] * x[:, 23]
    V3 = p["ASC_CAR"] + p["B_TIME"] * x[:, 25] + p["B_COST"] * x[:, 26]
    y = x[:, jnp.array(KEEP_COLS)]
    h = jnp.concatenate([y, V1[:, None], V2[:, None], V3[:, None]], axis=1)
    for li in range(1, 8):                       # input, layer1..layer6
        h = jnp.maximum(h @ p[f"w{li}"] + p[f"b{li}"], 0.0)
        h = h * p[f"bn{li}_scale"] + p[f"bn{li}_shift"]
    o = jnp.maximum(h @ p["w8"] + p["b8"], 0.0)  # output + ReLU (+dropout=id)
    return o * p["bn8_scale"] + p["bn8_shift"]


# --------------------------------- Main --------------------------------------
if __name__ == "__main__":
    key = jax.random.PRNGKey(0)
    k_param, k_x1, k_x2 = jax.random.split(key, 3)
    params = init_params(k_param)
    folded = fold_params(params)

    # bf16 epilogue only on bf16-VALU generations (v6e / v7x and newer).
    kind = jax.devices()[0].device_kind.lower()
    bf16_epilogue = not any(v in kind for v in ("v2", "v3", "v4", "v5"))

    fwd = functools.partial(mlp8_forward, bf16_epilogue=bf16_epilogue)

    # Small batch (single grid step).
    B = 64
    x = jax.random.normal(k_x1, (B, N_FEATURES), jnp.float32)
    out = jax.block_until_ready(fwd(x, folded))
    assert out.shape == (B, 3)

    # Tight check: kernel vs identical folded/bf16 math in pure JAX.
    np.testing.assert_allclose(
        np.asarray(out),
        np.asarray(folded_reference(x, folded, bf16_epilogue)),
        rtol=1e-3, atol=1e-3)
    # Sanity check vs the unfolded f32 module semantics (bf16 drift allowed).
    np.testing.assert_allclose(
        np.asarray(out), np.asarray(spec_reference(x, params)),
        rtol=1e-1, atol=1e-1)

    # Larger batch: exercises the multi-step (even) grid / megacore path.
    B2 = 4096
    x2 = jax.random.normal(k_x2, (B2, N_FEATURES), jnp.float32)
    out2 = jax.block_until_ready(fwd(x2, folded))
    assert out2.shape == (B2, 3)
    np.testing.assert_allclose(
        np.asarray(out2),
        np.asarray(folded_reference(x2, folded, bf16_epilogue)),
        rtol=1e-3, atol=1e-3)

    print("KERNEL_OK")
</pallas_src>

<mosaic_0001>
module attributes {stable_mosaic.version = 11 : i64} {
  func.func @kernel(%arg0: i32, %arg1: memref<64x27xf32, #tpu.memory_space<vmem>>, %arg2: memref<27x240xbf16, #tpu.memory_space<vmem>>, %arg3: memref<1x240xf32, #tpu.memory_space<vmem>>, %arg4: memref<240x200xbf16, #tpu.memory_space<vmem>>, %arg5: memref<1x200xbf16, #tpu.memory_space<vmem>>, %arg6: memref<200x140xbf16, #tpu.memory_space<vmem>>, %arg7: memref<1x140xbf16, #tpu.memory_space<vmem>>, %arg8: memref<140x100xbf16, #tpu.memory_space<vmem>>, %arg9: memref<1x100xbf16, #tpu.memory_space<vmem>>, %arg10: memref<100x60xbf16, #tpu.memory_space<vmem>>, %arg11: memref<1x60xbf16, #tpu.memory_space<vmem>>, %arg12: memref<60x45xbf16, #tpu.memory_space<vmem>>, %arg13: memref<1x45xbf16, #tpu.memory_space<vmem>>, %arg14: memref<45x30xbf16, #tpu.memory_space<vmem>>, %arg15: memref<1x30xbf16, #tpu.memory_space<vmem>>, %arg16: memref<30x3xbf16, #tpu.memory_space<vmem>>, %arg17: memref<1x3xf32, #tpu.memory_space<vmem>>, %arg18: memref<1x3xf32, #tpu.memory_space<vmem>>, %arg19: memref<1x3xf32, #tpu.memory_space<vmem>>, %arg20: memref<64x3xf32, #tpu.memory_space<vmem>>) attributes {dimension_semantics = [#tpu.dimension_semantics<parallel>], iteration_bounds = array<i64: 1>, scalar_prefetch = 0 : i64, scratch_operands = 0 : i64, tpu.core_type = #tpu.core_type<tc>, window_params = [{transform_indices = @transform_0, window_bounds = array<i64: 64, 27>}, {pipeline_mode = #tpu.pipeline_mode<synchronous>, transform_indices = @transform_1, window_bounds = array<i64: 27, 240>}, {pipeline_mode = #tpu.pipeline_mode<synchronous>, transform_indices = @transform_2, window_bounds = array<i64: 1, 240>}, {pipeline_mode = #tpu.pipeline_mode<synchronous>, transform_indices = @transform_3, window_bounds = array<i64: 240, 200>}, {pipeline_mode = #tpu.pipeline_mode<synchronous>, transform_indices = @transform_4, window_bounds = array<i64: 1, 200>}, {pipeline_mode = #tpu.pipeline_mode<synchronous>, transform_indices = @transform_5, window_bounds = array<i64: 200, 140>}, {pipeline_mode = #tpu.pipeline_mode<synchronous>, transform_indices = @transform_6, window_bounds = array<i64: 1, 140>}, {pipeline_mode = #tpu.pipeline_mode<synchronous>, transform_indices = @transform_7, window_bounds = array<i64: 140, 100>}, {pipeline_mode = #tpu.pipeline_mode<synchronous>, transform_indices = @transform_8, window_bounds = array<i64: 1, 100>}, {pipeline_mode = #tpu.pipeline_mode<synchronous>, transform_indices = @transform_9, window_bounds = array<i64: 100, 60>}, {pipeline_mode = #tpu.pipeline_mode<synchronous>, transform_indices = @transform_10, window_bounds = array<i64: 1, 60>}, {pipeline_mode = #tpu.pipeline_mode<synchronous>, transform_indices = @transform_11, window_bounds = array<i64: 60, 45>}, {pipeline_mode = #tpu.pipeline_mode<synchronous>, transform_indices = @transform_12, window_bounds = array<i64: 1, 45>}, {pipeline_mode = #tpu.pipeline_mode<synchronous>, transform_indices = @transform_13, window_bounds = array<i64: 45, 30>}, {pipeline_mode = #tpu.pipeline_mode<synchronous>, transform_indices = @transform_14, window_bounds = array<i64: 1, 30>}, {pipeline_mode = #tpu.pipeline_mode<synchronous>, transform_indices = @transform_15, window_bounds = array<i64: 30, 3>}, {pipeline_mode = #tpu.pipeline_mode<synchronous>, transform_indices = @transform_16, window_bounds = array<i64: 1, 3>}, {pipeline_mode = #tpu.pipeline_mode<synchronous>, transform_indices = @transform_17, window_bounds = array<i64: 1, 3>}, {pipeline_mode = #tpu.pipeline_mode<synchronous>, transform_indices = @transform_18, window_bounds = array<i64: 1, 3>}, {transform_indices = @transform_19, window_bounds = array<i64: 64, 3>}]} {
    %c0 = arith.constant 0 : index
    %c0_0 = arith.constant 0 : index
    %0 = vector.load %arg1[%c0, %c0_0] : memref<64x27xf32, #tpu.memory_space<vmem>>, vector<64x27xf32>
    %1 = arith.truncf %0 : vector<64x27xf32> to vector<64x27xbf16>
    %c0_1 = arith.constant 0 : index
    %c0_2 = arith.constant 0 : index
    %2 = vector.load %arg2[%c0_1, %c0_2] : memref<27x240xbf16, #tpu.memory_space<vmem>>, vector<27x240xbf16>
    %cst = arith.constant dense<0.000000e+00> : vector<64x240xf32>
    %3 = tpu.matmul %1, %2, %cst {dimension_numbers = #tpu.dot_dimension_numbers<[1], [0], [0], [1], [0, 0, 1, 1], [], []>} : vector<64x27xbf16>, vector<27x240xbf16>, vector<64x240xf32> -> vector<64x240xf32>
    %c0_3 = arith.constant 0 : index
    %c0_4 = arith.constant 0 : index
    %4 = vector.load %arg3[%c0_3, %c0_4] : memref<1x240xf32, #tpu.memory_space<vmem>>, vector<1x240xf32>
    %5 = vector.broadcast %4 : vector<1x240xf32> to vector<64x240xf32>
    %6 = arith.addf %3, %5 : vector<64x240xf32>
    %cst_5 = arith.constant 0.000000e+00 : f32
    %7 = vector.broadcast %cst_5 : f32 to vector<64x240xf32>
    %8 = arith.maximumf %6, %7 : vector<64x240xf32>
    %9 = arith.truncf %8 : vector<64x240xf32> to vector<64x240xbf16>
    %c0_6 = arith.constant 0 : index
    %c0_7 = arith.constant 0 : index
    %10 = vector.load %arg4[%c0_6, %c0_7] : memref<240x200xbf16, #tpu.memory_space<vmem>>, vector<240x200xbf16>
    %cst_8 = arith.constant dense<0.000000e+00> : vector<64x200xf32>
    %11 = tpu.matmul %9, %10, %cst_8 {dimension_numbers = #tpu.dot_dimension_numbers<[1], [0], [0], [1], [0, 0, 1, 1], [], []>} : vector<64x240xbf16>, vector<240x200xbf16>, vector<64x200xf32> -> vector<64x200xf32>
    %12 = arith.truncf %11 : vector<64x200xf32> to vector<64x200xbf16>
    %c0_9 = arith.constant 0 : index
    %c0_10 = arith.constant 0 : index
    %13 = vector.load %arg5[%c0_9, %c0_10] : memref<1x200xbf16, #tpu.memory_space<vmem>>, vector<1x200xbf16>
    %14 = vector.broadcast %13 : vector<1x200xbf16> to vector<64x200xbf16>
    %15 = arith.addf %12, %14 : vector<64x200xbf16>
    %cst_11 = arith.constant 0.000000e+00 : bf16
    %16 = vector.broadcast %cst_11 : bf16 to vector<64x200xbf16>
    %17 = arith.maximumf %15, %16 : vector<64x200xbf16>
    %c0_12 = arith.constant 0 : index
    %c0_13 = arith.constant 0 : index
    %18 = vector.load %arg6[%c0_12, %c0_13] : memref<200x140xbf16, #tpu.memory_space<vmem>>, vector<200x140xbf16>
    %cst_14 = arith.constant dense<0.000000e+00> : vector<64x140xf32>
    %19 = tpu.matmul %17, %18, %cst_14 {dimension_numbers = #tpu.dot_dimension_numbers<[1], [0], [0], [1], [0, 0, 1, 1], [], []>} : vector<64x200xbf16>, vector<200x140xbf16>, vector<64x140xf32> -> vector<64x140xf32>
    %20 = arith.truncf %19 : vector<64x140xf32> to vector<64x140xbf16>
    %c0_15 = arith.constant 0 : index
    %c0_16 = arith.constant 0 : index
    %21 = vector.load %arg7[%c0_15, %c0_16] : memref<1x140xbf16, #tpu.memory_space<vmem>>, vector<1x140xbf16>
    %22 = vector.broadcast %21 : vector<1x140xbf16> to vector<64x140xbf16>
    %23 = arith.addf %20, %22 : vector<64x140xbf16>
    %cst_17 = arith.constant 0.000000e+00 : bf16
    %24 = vector.broadcast %cst_17 : bf16 to vector<64x140xbf16>
    %25 = arith.maximumf %23, %24 : vector<64x140xbf16>
    %c0_18 = arith.constant 0 : index
    %c0_19 = arith.constant 0 : index
    %26 = vector.load %arg8[%c0_18, %c0_19] : memref<140x100xbf16, #tpu.memory_space<vmem>>, vector<140x100xbf16>
    %cst_20 = arith.constant dense<0.000000e+00> : vector<64x100xf32>
    %27 = tpu.matmul %25, %26, %cst_20 {dimension_numbers = #tpu.dot_dimension_numbers<[1], [0], [0], [1], [0, 0, 1, 1], [], []>} : vector<64x140xbf16>, vector<140x100xbf16>, vector<64x100xf32> -> vector<64x100xf32>
    %28 = arith.truncf %27 : vector<64x100xf32> to vector<64x100xbf16>
    %c0_21 = arith.constant 0 : index
    %c0_22 = arith.constant 0 : index
    %29 = vector.load %arg9[%c0_21, %c0_22] : memref<1x100xbf16, #tpu.memory_space<vmem>>, vector<1x100xbf16>
    %30 = vector.broadcast %29 : vector<1x100xbf16> to vector<64x100xbf16>
    %31 = arith.addf %28, %30 : vector<64x100xbf16>
    %cst_23 = arith.constant 0.000000e+00 : bf16
    %32 = vector.broadcast %cst_23 : bf16 to vector<64x100xbf16>
    %33 = arith.maximumf %31, %32 : vector<64x100xbf16>
    %c0_24 = arith.constant 0 : index
    %c0_25 = arith.constant 0 : index
    %34 = vector.load %arg10[%c0_24, %c0_25] : memref<100x60xbf16, #tpu.memory_space<vmem>>, vector<100x60xbf16>
    %cst_26 = arith.constant dense<0.000000e+00> : vector<64x60xf32>
    %35 = tpu.matmul %33, %34, %cst_26 {dimension_numbers = #tpu.dot_dimension_numbers<[1], [0], [0], [1], [0, 0, 1, 1], [], []>} : vector<64x100xbf16>, vector<100x60xbf16>, vector<64x60xf32> -> vector<64x60xf32>
    %36 = arith.truncf %35 : vector<64x60xf32> to vector<64x60xbf16>
    %c0_27 = arith.constant 0 : index
    %c0_28 = arith.constant 0 : index
    %37 = vector.load %arg11[%c0_27, %c0_28] : memref<1x60xbf16, #tpu.memory_space<vmem>>, vector<1x60xbf16>
    %38 = vector.broadcast %37 : vector<1x60xbf16> to vector<64x60xbf16>
    %39 = arith.addf %36, %38 : vector<64x60xbf16>
    %cst_29 = arith.constant 0.000000e+00 : bf16
    %40 = vector.broadcast %cst_29 : bf16 to vector<64x60xbf16>
    %41 = arith.maximumf %39, %40 : vector<64x60xbf16>
    %c0_30 = arith.constant 0 : index
    %c0_31 = arith.constant 0 : index
    %42 = vector.load %arg12[%c0_30, %c0_31] : memref<60x45xbf16, #tpu.memory_space<vmem>>, vector<60x45xbf16>
    %cst_32 = arith.constant dense<0.000000e+00> : vector<64x45xf32>
    %43 = tpu.matmul %41, %42, %cst_32 {dimension_numbers = #tpu.dot_dimension_numbers<[1], [0], [0], [1], [0, 0, 1, 1], [], []>} : vector<64x60xbf16>, vector<60x45xbf16>, vector<64x45xf32> -> vector<64x45xf32>
    %44 = arith.truncf %43 : vector<64x45xf32> to vector<64x45xbf16>
    %c0_33 = arith.constant 0 : index
    %c0_34 = arith.constant 0 : index
    %45 = vector.load %arg13[%c0_33, %c0_34] : memref<1x45xbf16, #tpu.memory_space<vmem>>, vector<1x45xbf16>
    %46 = vector.broadcast %45 : vector<1x45xbf16> to vector<64x45xbf16>
    %47 = arith.addf %44, %46 : vector<64x45xbf16>
    %cst_35 = arith.constant 0.000000e+00 : bf16
    %48 = vector.broadcast %cst_35 : bf16 to vector<64x45xbf16>
    %49 = arith.maximumf %47, %48 : vector<64x45xbf16>
    %c0_36 = arith.constant 0 : index
    %c0_37 = arith.constant 0 : index
    %50 = vector.load %arg14[%c0_36, %c0_37] : memref<45x30xbf16, #tpu.memory_space<vmem>>, vector<45x30xbf16>
    %cst_38 = arith.constant dense<0.000000e+00> : vector<64x30xf32>
    %51 = tpu.matmul %49, %50, %cst_38 {dimension_numbers = #tpu.dot_dimension_numbers<[1], [0], [0], [1], [0, 0, 1, 1], [], []>} : vector<64x45xbf16>, vector<45x30xbf16>, vector<64x30xf32> -> vector<64x30xf32>
    %52 = arith.truncf %51 : vector<64x30xf32> to vector<64x30xbf16>
    %c0_39 = arith.constant 0 : index
    %c0_40 = arith.constant 0 : index
    %53 = vector.load %arg15[%c0_39, %c0_40] : memref<1x30xbf16, #tpu.memory_space<vmem>>, vector<1x30xbf16>
    %54 = vector.broadcast %53 : vector<1x30xbf16> to vector<64x30xbf16>
    %55 = arith.addf %52, %54 : vector<64x30xbf16>
    %cst_41 = arith.constant 0.000000e+00 : bf16
    %56 = vector.broadcast %cst_41 : bf16 to vector<64x30xbf16>
    %57 = arith.maximumf %55, %56 : vector<64x30xbf16>
    %c0_42 = arith.constant 0 : index
    %c0_43 = arith.constant 0 : index
    %58 = vector.load %arg16[%c0_42, %c0_43] : memref<30x3xbf16, #tpu.memory_space<vmem>>, vector<30x3xbf16>
    %cst_44 = arith.constant dense<0.000000e+00> : vector<64x3xf32>
    %59 = tpu.matmul %57, %58, %cst_44 {dimension_numbers = #tpu.dot_dimension_numbers<[1], [0], [0], [1], [0, 0, 1, 1], [], []>} : vector<64x30xbf16>, vector<30x3xbf16>, vector<64x3xf32> -> vector<64x3xf32>
    %c0_45 = arith.constant 0 : index
    %c0_46 = arith.constant 0 : index
    %60 = vector.load %arg17[%c0_45, %c0_46] : memref<1x3xf32, #tpu.memory_space<vmem>>, vector<1x3xf32>
    %61 = vector.broadcast %60 : vector<1x3xf32> to vector<64x3xf32>
    %62 = arith.addf %59, %61 : vector<64x3xf32>
    %cst_47 = arith.constant 0.000000e+00 : f32
    %63 = vector.broadcast %cst_47 : f32 to vector<64x3xf32>
    %64 = arith.maximumf %62, %63 : vector<64x3xf32>
    %c0_48 = arith.constant 0 : index
    %c0_49 = arith.constant 0 : index
    %65 = vector.load %arg18[%c0_48, %c0_49] : memref<1x3xf32, #tpu.memory_space<vmem>>, vector<1x3xf32>
    %66 = vector.broadcast %65 : vector<1x3xf32> to vector<64x3xf32>
    %67 = arith.mulf %64, %66 : vector<64x3xf32>
    %c0_50 = arith.constant 0 : index
    %c0_51 = arith.constant 0 : index
    %68 = vector.load %arg19[%c0_50, %c0_51] : memref<1x3xf32, #tpu.memory_space<vmem>>, vector<1x3xf32>
    %69 = vector.broadcast %68 : vector<1x3xf32> to vector<64x3xf32>
    %70 = arith.addf %67, %69 : vector<64x3xf32>
    %c0_52 = arith.constant 0 : index
    %c0_53 = arith.constant 0 : index
    %71 = vector.load %arg20[%c0_52, %c0_53] : memref<64x3xf32, #tpu.memory_space<vmem>>, vector<64x3xf32>
    tpu.vector_store %arg20[%c0_52, %c0_53], %70 {strides = array<i32>} : memref<64x3xf32, #tpu.memory_space<vmem>>, vector<64x3xf32>,
    return
  }
  func.func @transform_0(%arg0: i32) -> (i32, i32) {
    %c0_i32 = arith.constant 0 : i32
    %c0_i32_0 = arith.constant 0 : i32
    return %arg0, %c0_i32 : i32, i32
  }
  func.func @transform_1(%arg0: i32) -> (i32, i32) {
    %c0_i32 = arith.constant 0 : i32
    %c0_i32_0 = arith.constant 0 : i32
    %c0_i32_1 = arith.constant 0 : i32
    return %c0_i32, %c0_i32_0 : i32, i32
  }
  func.func @transform_2(%arg0: i32) -> (i32, i32) {
    %c0_i32 = arith.constant 0 : i32
    %c0_i32_0 = arith.constant 0 : i32
    %c0_i32_1 = arith.constant 0 : i32
    return %c0_i32, %c0_i32_0 : i32, i32
  }
  func.func @transform_3(%arg0: i32) -> (i32, i32) {
    %c0_i32 = arith.constant 0 : i32
    %c0_i32_0 = arith.constant 0 : i32
    %c0_i32_1 = arith.constant 0 : i32
    return %c0_i32, %c0_i32_0 : i32, i32
  }
  func.func @transform_4(%arg0: i32) -> (i32, i32) {
    %c0_i32 = arith.constant 0 : i32
    %c0_i32_0 = arith.constant 0 : i32
    %c0_i32_1 = arith.constant 0 : i32
    return %c0_i32, %c0_i32_0 : i32, i32
  }
  func.func @transform_5(%arg0: i32) -> (i32, i32) {
    %c0_i32 = arith.constant 0 : i32
    %c0_i32_0 = arith.constant 0 : i32
    %c0_i32_1 = arith.constant 0 : i32
    return %c0_i32, %c0_i32_0 : i32, i32
  }
  func.func @transform_6(%arg0: i32) -> (i32, i32) {
    %c0_i32 = arith.constant 0 : i32
    %c0_i32_0 = arith.constant 0 : i32
    %c0_i32_1 = arith.constant 0 : i32
    return %c0_i32, %c0_i32_0 : i32, i32
  }
  func.func @transform_7(%arg0: i32) -> (i32, i32) {
    %c0_i32 = arith.constant 0 : i32
    %c0_i32_0 = arith.constant 0 : i32
    %c0_i32_1 = arith.constant 0 : i32
    return %c0_i32, %c0_i32_0 : i32, i32
  }
  func.func @transform_8(%arg0: i32) -> (i32, i32) {
    %c0_i32 = arith.constant 0 : i32
    %c0_i32_0 = arith.constant 0 : i32
    %c0_i32_1 = arith.constant 0 : i32
    return %c0_i32, %c0_i32_0 : i32, i32
  }
  func.func @transform_9(%arg0: i32) -> (i32, i32) {
    %c0_i32 = arith.constant 0 : i32
    %c0_i32_0 = arith.constant 0 : i32
    %c0_i32_1 = arith.constant 0 : i32
    return %c0_i32, %c0_i32_0 : i32, i32
  }
  func.func @transform_10(%arg0: i32) -> (i32, i32) {
    %c0_i32 = arith.constant 0 : i32
    %c0_i32_0 = arith.constant 0 : i32
    %c0_i32_1 = arith.constant 0 : i32
    return %c0_i32, %c0_i32_0 : i32, i32
  }
  func.func @transform_11(%arg0: i32) -> (i32, i32) {
    %c0_i32 = arith.constant 0 : i32
    %c0_i32_0 = arith.constant 0 : i32
    %c0_i32_1 = arith.constant 0 : i32
    return %c0_i32, %c0_i32_0 : i32, i32
  }
  func.func @transform_12(%arg0: i32) -> (i32, i32) {
    %c0_i32 = arith.constant 0 : i32
    %c0_i32_0 = arith.constant 0 : i32
    %c0_i32_1 = arith.constant 0 : i32
    return %c0_i32, %c0_i32_0 : i32, i32
  }
  func.func @transform_13(%arg0: i32) -> (i32, i32) {
    %c0_i32 = arith.constant 0 : i32
    %c0_i32_0 = arith.constant 0 : i32
    %c0_i32_1 = arith.constant 0 : i32
    return %c0_i32, %c0_i32_0 : i32, i32
  }
  func.func @transform_14(%arg0: i32) -> (i32, i32) {
    %c0_i32 = arith.constant 0 : i32
    %c0_i32_0 = arith.constant 0 : i32
    %c0_i32_1 = arith.constant 0 : i32
    return %c0_i32, %c0_i32_0 : i32, i32
  }
  func.func @transform_15(%arg0: i32) -> (i32, i32) {
    %c0_i32 = arith.constant 0 : i32
    %c0_i32_0 = arith.constant 0 : i32
    %c0_i32_1 = arith.constant 0 : i32
    return %c0_i32, %c0_i32_0 : i32, i32
  }
  func.func @transform_16(%arg0: i32) -> (i32, i32) {
    %c0_i32 = arith.constant 0 : i32
    %c0_i32_0 = arith.constant 0 : i32
    %c0_i32_1 = arith.constant 0 : i32
    return %c0_i32, %c0_i32_0 : i32, i32
  }
  func.func @transform_17(%arg0: i32) -> (i32, i32) {
    %c0_i32 = arith.constant 0 : i32
    %c0_i32_0 = arith.constant 0 : i32
    %c0_i32_1 = arith.constant 0 : i32
    return %c0_i32, %c0_i32_0 : i32, i32
  }
  func.func @transform_18(%arg0: i32) -> (i32, i32) {
    %c0_i32 = arith.constant 0 : i32
    %c0_i32_0 = arith.constant 0 : i32
    %c0_i32_1 = arith.constant 0 : i32
    return %c0_i32, %c0_i32_0 : i32, i32
  }
  func.func @transform_19(%arg0: i32) -> (i32, i32) {
    %c0_i32 = arith.constant 0 : i32
    %c0_i32_0 = arith.constant 0 : i32
    return %arg0, %c0_i32 : i32, i32
  }
}

</mosaic_0001>

<llo_original>
// kernel: mlp8_forward.1
$region0: #{mlp8_forward.1}
  #allocation0 [shape = 'u32[]', space=smem, size = 0x4, offset = 0x4, fixed_abs, tag = 'smem constant byte address 0x4 - core index']
  #allocation1 [shape = 'u32[144,128]{1,0:T(1,128)}', space=vmem, size = 0x12000, scoped, tag = 'internal scratch']
  %s0 = inlined_call_operand.vmem [shape: f32[64,27], index: 0, kind: input, shape index: {}]
  %s1 = inlined_call_operand.vmem [shape: bf16[27,240], index: 1, kind: input, shape index: {}]
  %s2 = inlined_call_operand.vmem [shape: f32[1,240], index: 2, kind: input, shape index: {}]
  %s3 = inlined_call_operand.vmem [shape: bf16[240,200], index: 3, kind: input, shape index: {}]
  %s4 = inlined_call_operand.vmem [shape: bf16[1,200], index: 4, kind: input, shape index: {}]
  %s5 = inlined_call_operand.vmem [shape: bf16[200,140], index: 5, kind: input, shape index: {}]
  %s6 = inlined_call_operand.vmem [shape: bf16[1,140], index: 6, kind: input, shape index: {}]
  %s7 = inlined_call_operand.vmem [shape: bf16[140,100], index: 7, kind: input, shape index: {}]
  %s8 = inlined_call_operand.vmem [shape: bf16[1,100], index: 8, kind: input, shape index: {}]
  %s9 = inlined_call_operand.vmem [shape: bf16[100,60], index: 9, kind: input, shape index: {}]
  %s10 = inlined_call_operand.vmem [shape: bf16[1,60], index: 10, kind: input, shape index: {}]
  %s11 = inlined_call_operand.vmem [shape: bf16[60,45], index: 11, kind: input, shape index: {}]
  %s12 = inlined_call_operand.vmem [shape: bf16[1,45], index: 12, kind: input, shape index: {}]
  %s13 = inlined_call_operand.vmem [shape: bf16[45,30], index: 13, kind: input, shape index: {}]
  %s14 = inlined_call_operand.vmem [shape: bf16[1,30], index: 14, kind: input, shape index: {}]
  %s15 = inlined_call_operand.vmem [shape: bf16[30,3], index: 15, kind: input, shape index: {}]
  %s16 = inlined_call_operand.vmem [shape: f32[1,3], index: 16, kind: input, shape index: {}]
  %s17 = inlined_call_operand.vmem [shape: f32[1,3], index: 17, kind: input, shape index: {}]
  %s18 = inlined_call_operand.vmem [shape: f32[1,3], index: 18, kind: input, shape index: {}]
  %s19 = inlined_call_operand.vmem [shape: f32[64,3], index: 19, kind: output, shape index: {}]
  %s20 = sld [smem:[#allocation0]]
  $region86: #{mlp8_forward.1} parent=0
    _
  %s22 = ssub.s32 1, %s20
  %s23 = scalar_select 0, %s22, %s20
  // Predicated region
  $region2: #{mlp8_forward.1} parent=0 // pred_check
    _
  $region3: #{mlp8_forward.1} parent=0 // pred_check_branch
    %25 = sbr.rel (0) target = $region5
  $region4: #{mlp8_forward.1} parent=0 // pred_region
    _
  $region5: #{mlp8_forward.1} parent=0 // pred_fallthru
    _
  // Predicated region
  $region6: #{mlp8_forward.1} parent=0 // pred_check
    _
  $region7: #{mlp8_forward.1} parent=0 // pred_check_branch
    %27 = sbr.rel (0) target = $region9
  $region8: #{mlp8_forward.1} parent=0 // pred_region
    _
  $region9: #{mlp8_forward.1} parent=0 // pred_fallthru
    _
  // Predicated region
  $region10: #{mlp8_forward.1} parent=0 // pred_check
    _
  $region11: #{mlp8_forward.1} parent=0 // pred_check_branch
    %29 = sbr.rel (0) target = $region13
  $region12: #{mlp8_forward.1} parent=0 // pred_region
    _
  $region13: #{mlp8_forward.1} parent=0 // pred_fallthru
    _
  // Predicated region
  $region14: #{mlp8_forward.1} parent=0 // pred_check
    _
  $region15: #{mlp8_forward.1} parent=0 // pred_check_branch
    %31 = sbr.rel (0) target = $region17
  $region16: #{mlp8_forward.1} parent=0 // pred_region
    _
  $region17: #{mlp8_forward.1} parent=0 // pred_fallthru
    _
  // Predicated region
  $region18: #{mlp8_forward.1} parent=0 // pred_check
    _
  $region19: #{mlp8_forward.1} parent=0 // pred_check_branch
    %33 = sbr.rel (0) target = $region21
  $region20: #{mlp8_forward.1} parent=0 // pred_region
    _
  $region21: #{mlp8_forward.1} parent=0 // pred_fallthru
    _
  // Predicated region
  $region22: #{mlp8_forward.1} parent=0 // pred_check
    _
  $region23: #{mlp8_forward.1} parent=0 // pred_check_branch
    %35 = sbr.rel (0) target = $region25
  $region24: #{mlp8_forward.1} parent=0 // pred_region
    _
  $region25: #{mlp8_forward.1} parent=0 // pred_fallthru
    _
  // Predicated region
  $region26: #{mlp8_forward.1} parent=0 // pred_check
    _
  $region27: #{mlp8_forward.1} parent=0 // pred_check_branch
    %37 = sbr.rel (0) target = $region29
  $region28: #{mlp8_forward.1} parent=0 // pred_region
    _
  $region29: #{mlp8_forward.1} parent=0 // pred_fallthru
    _
  // Predicated region
  $region30: #{mlp8_forward.1} parent=0 // pred_check
    _
  $region31: #{mlp8_forward.1} parent=0 // pred_check_branch
    %39 = sbr.rel (0) target = $region33
  $region32: #{mlp8_forward.1} parent=0 // pred_region
    _
  $region33: #{mlp8_forward.1} parent=0 // pred_fallthru
    _
  // Predicated region
  $region34: #{mlp8_forward.1} parent=0 // pred_check
    _
  $region35: #{mlp8_forward.1} parent=0 // pred_check_branch
    %41 = sbr.rel (0) target = $region37
  $region36: #{mlp8_forward.1} parent=0 // pred_region
    _
  $region37: #{mlp8_forward.1} parent=0 // pred_fallthru
    _
  // Predicated region
  $region38: #{mlp8_forward.1} parent=0 // pred_check
    _
  $region39: #{mlp8_forward.1} parent=0 // pred_check_branch
    %43 = sbr.rel (0) target = $region41
  $region40: #{mlp8_forward.1} parent=0 // pred_region
    _
  $region41: #{mlp8_forward.1} parent=0 // pred_fallthru
    _
  // Predicated region
  $region42: #{mlp8_forward.1} parent=0 // pred_check
    _
  $region43: #{mlp8_forward.1} parent=0 // pred_check_branch
    %45 = sbr.rel (0) target = $region45
  $region44: #{mlp8_forward.1} parent=0 // pred_region
    _
  $region45: #{mlp8_forward.1} parent=0 // pred_fallthru
    _
  // Predicated region
  $region46: #{mlp8_forward.1} parent=0 // pred_check
    _
  $region47: #{mlp8_forward.1} parent=0 // pred_check_branch
    %47 = sbr.rel (0) target = $region49
  $region48: #{mlp8_forward.1} parent=0 // pred_region
    _
  $region49: #{mlp8_forward.1} parent=0 // pred_fallthru
    _
  // Predicated region
  $region50: #{mlp8_forward.1} parent=0 // pred_check
    _
  $region51: #{mlp8_forward.1} parent=0 // pred_check_branch
    %49 = sbr.rel (0) target = $region53
  $region52: #{mlp8_forward.1} parent=0 // pred_region
    _
  $region53: #{mlp8_forward.1} parent=0 // pred_fallthru
    _
  // Predicated region
  $region54: #{mlp8_forward.1} parent=0 // pred_check
    _
  $region55: #{mlp8_forward.1} parent=0 // pred_check_branch
    %51 = sbr.rel (0) target = $region57
  $region56: #{mlp8_forward.1} parent=0 // pred_region
    _
  $region57: #{mlp8_forward.1} parent=0 // pred_fallthru
    _
  // Predicated region
  $region58: #{mlp8_forward.1} parent=0 // pred_check
    _
  $region59: #{mlp8_forward.1} parent=0 // pred_check_branch
    %53 = sbr.rel (0) target = $region61
  $region60: #{mlp8_forward.1} parent=0 // pred_region
    _
  $region61: #{mlp8_forward.1} parent=0 // pred_fallthru
    _
  // Predicated region
  $region62: #{mlp8_forward.1} parent=0 // pred_check
    _
  $region63: #{mlp8_forward.1} parent=0 // pred_check_branch
    %55 = sbr.rel (0) target = $region65
  $region64: #{mlp8_forward.1} parent=0 // pred_region
    _
  $region65: #{mlp8_forward.1} parent=0 // pred_fallthru
    _
  // Predicated region
  $region66: #{mlp8_forward.1} parent=0 // pred_check
    _
  $region67: #{mlp8_forward.1} parent=0 // pred_check_branch
    %57 = sbr.rel (0) target = $region69
  $region68: #{mlp8_forward.1} parent=0 // pred_region
    _
  $region69: #{mlp8_forward.1} parent=0 // pred_fallthru
    _
  // Predicated region
  $region70: #{mlp8_forward.1} parent=0 // pred_check
    _
  $region71: #{mlp8_forward.1} parent=0 // pred_check_branch
    %59 = sbr.rel (0) target = $region73
  $region72: #{mlp8_forward.1} parent=0 // pred_region
    _
  $region73: #{mlp8_forward.1} parent=0 // pred_fallthru
    _
  // Predicated region
  $region74: #{mlp8_forward.1} parent=0 // pred_check
    _
  $region75: #{mlp8_forward.1} parent=0 // pred_check_branch
    %61 = sbr.rel (0) target = $region77
  $region76: #{mlp8_forward.1} parent=0 // pred_region
    _
  $region77: #{mlp8_forward.1} parent=0 // pred_fallthru
    _
  %v63 = vld [vmem:[%s0] sm:$0xff]
  %v64 = vld [vmem:[%s0 + $0x8] sm:$0xff]
  %v65 = vld [vmem:[%s0 + $0x10] sm:$0xff]
  %v66 = vld [vmem:[%s0 + $0x18] sm:$0xff]
  %v67 = vld [vmem:[%s0 + $0x20] sm:$0xff]
  %v68 = vld [vmem:[%s0 + $0x28] sm:$0xff]
  %v69 = vld [vmem:[%s0 + $0x30] sm:$0xff]
  %v70 = vld [vmem:[%s0 + $0x38] sm:$0xff]
  %v71 = vpack.c.bf16 %v64, %v63
  %v72 = vpack.c.bf16 %v66, %v65
  %v73 = vpack.c.bf16 %v68, %v67
  %v74 = vpack.c.bf16 %v70, %v69
  %v75 = vld [vmem:[%s1] sm:$0xff]
  %v76 = vld [vmem:[%s1 + $0x8] sm:$0xff]
  %v77 = vld [vmem:[%s1 + $0x10] sm:$0xff]
  %v78 = vld [vmem:[%s1 + $0x18] sm:$0x33]
  %v79 = vld [vmem:[%s2] sm:$0x3]
  %v81 = vlaneseq
  %v82 = vshrl.u32 %v81, 7
  %v83 = vsub.s32 0, %v82
  %v84 = vrot.slane %v79, %v83
  %v85 = vlaneseq
  %v86 = vshrl.u32 %v85, 7
  %v87 = vsub.s32 1, %v86
  %v88 = vrot.slane %v79, %v87
  %v95 = vunpack.c.l.b16 %v75
  %v96 = vunpack.c.h.b16 %v75
  %v97 = vunpack.c.l.b16 %v76
  %v98 = vunpack.c.h.b16 %v76
  %v99 = vunpack.c.l.b16 %v77
  %v100 = vunpack.c.h.b16 %v77
  %v101 = vunpack.c.l.b16 %v78
  %v102 = vunpack.c.h.b16 %v78
  %v103 = vpack.c.b16 %v97, %v95
  %v104 = vpack.c.b16 %v98, %v96
  %v105 = vpack.c.b16 %v101, %v99
  %v106 = vpack.c.b16 %v102, %v100
  %vm109 = vcmask 220160
  %v111 = vsel %vm109, %v71, 0
  %v114 = vsel %vm109, %v72, 0
  %v117 = vsel %vm109, %v73, 0
  %v120 = vsel %vm109, %v74, 0
  %vm122 = vcmask 1044480
  %vm123 = vcmask 1045504
  %v124 = vsel %vm122, 4294967295, 65535
  %v125 = vsel %vm123, %v124, 0
  %v127 = vand.u32 %v105, %v125
  %v130 = vand.u32 %v106, %v125
  %132 = vmatprep.subr.bf16.mxu0 %v104
  %133 = vmatpush1.bf16.msra.mxu0 %v103
  %134 = vmatprep.subr.bf16.mxu0 %v130
  %135 = vmatpush1.bf16.msra.mxu0 %v127
  %136 = vmatprep.subr.bf16.mxu0 0
  %137 = vmatpush1.bf16.msra.mxu0 0
  %138 = vmatprep.subr.bf16.mxu0 0
  %139 = vmatpush1.bf16.msra.mxu0 0
  %140 = vmatprep.subr.bf16.mxu0 0
  %141 = vmatpush1.bf16.msra.mxu0 0
  %142 = vmatprep.subr.bf16.mxu0 0
  %143 = vmatpush1.bf16.msra.mxu0 0
  %144 = vmatprep.subr.bf16.mxu0 0
  %145 = vmatpush1.bf16.msra.mxu0 0
  %146 = vmatprep.subr.bf16.mxu0 0
  %147 = vmatpush1.bf16.msra.mxu0 0
  %148 = vmatprep.subr.bf16.mxu0 0
  %149 = vmatpush1.bf16.msra.mxu0 0
  %150 = vmatprep.subr.bf16.mxu0 0
  %151 = vmatpush1.bf16.msra.mxu0 0
  %152 = vmatprep.subr.bf16.mxu0 0
  %153 = vmatpush1.bf16.msra.mxu0 0
  %154 = vmatprep.subr.bf16.mxu0 0
  %155 = vmatpush1.bf16.msra.mxu0 0
  %156 = vmatprep.subr.bf16.mxu0 0
  %157 = vmatpush1.bf16.msra.mxu0 0
  %158 = vmatprep.subr.bf16.mxu0 0
  %159 = vmatpush1.bf16.msra.mxu0 0
  %160 = vmatprep.subr.bf16.mxu0 0
  %161 = vmatpush1.bf16.msra.mxu0 0
  %162 = vmatprep.subr.bf16.mxu0 0
  %163 = vmatpush1.bf16.msra.mxu0 0
  %164 = vmatprep.mubr.bf16.mxu0 0
  %165 = vmatmul.mubr.bf16.gmra.mrb[0].mxu0 %v111
  %v166 = vpop.f32.mrb[0].mxu0
  %v167 = vadd.f32 %v84, %v166
  %v168 = vpop.f32.mrb[0].mxu0
  %v169 = vadd.f32 %v88, %v168
  %v170 = vpop.f32.mrb[0].mxu0
  %v171 = vadd.f32 %v84, %v170
  %v172 = vpop.f32.mrb[0].mxu0
  %v173 = vadd.f32 %v88, %v172
  %174 = vmatprep.mubr.bf16.mxu0 0
  %175 = vmatmul.mubr.bf16.gmra.mrb[0].mxu0 %v114
  %v176 = vpop.f32.mrb[0].mxu0
  %v177 = vadd.f32 %v84, %v176
  %v178 = vpop.f32.mrb[0].mxu0
  %v179 = vadd.f32 %v88, %v178
  %v180 = vpop.f32.mrb[0].mxu0
  %v181 = vadd.f32 %v84, %v180
  %v182 = vpop.f32.mrb[0].mxu0
  %v183 = vadd.f32 %v88, %v182
  %184 = vmatprep.mubr.bf16.mxu0 0
  %185 = vmatmul.mubr.bf16.gmra.mrb[0].mxu0 %v117
  %v186 = vpop.f32.mrb[0].mxu0
  %v187 = vadd.f32 %v84, %v186
  %v188 = vpop.f32.mrb[0].mxu0
  %v189 = vadd.f32 %v88, %v188
  %v190 = vpop.f32.mrb[0].mxu0
  %v191 = vadd.f32 %v84, %v190
  %v192 = vpop.f32.mrb[0].mxu0
  %v193 = vadd.f32 %v88, %v192
  %194 = vmatprep.mubr.bf16.mxu0 0
  %195 = vmatmul.mubr.bf16.gmra.mrb[0].mxu0 %v120
  %v196 = vpop.f32.mrb[0].mxu0
  %v197 = vadd.f32 %v84, %v196
  %v198 = vpop.f32.mrb[0].mxu0
  %v199 = vadd.f32 %v88, %v198
  %v200 = vpop.f32.mrb[0].mxu0
  %v201 = vadd.f32 %v84, %v200
  %v202 = vpop.f32.mrb[0].mxu0
  %v203 = vadd.f32 %v88, %v202
  %204 = vdwg.mxu0
  %v205 = vmax.f32 %v167, 0.0
  %v206 = vmax.f32 %v169, 0.0
  %v207 = vmax.f32 %v171, 0.0
  %v208 = vmax.f32 %v173, 0.0
  %v209 = vmax.f32 %v177, 0.0
  %v210 = vmax.f32 %v179, 0.0
  %v211 = vmax.f32 %v181, 0.0
  %v212 = vmax.f32 %v183, 0.0
  %v213 = vmax.f32 %v187, 0.0
  %v214 = vmax.f32 %v189, 0.0
  %v215 = vmax.f32 %v191, 0.0
  %v216 = vmax.f32 %v193, 0.0
  %v217 = vmax.f32 %v197, 0.0
  %v218 = vmax.f32 %v199, 0.0
  %v219 = vmax.f32 %v201, 0.0
  %v220 = vmax.f32 %v203, 0.0
  %v221 = vpack.c.bf16 %v207, %v205
  %v222 = vpack.c.bf16 %v208, %v206
  %v223 = vpack.c.bf16 %v211, %v209
  %v224 = vpack.c.bf16 %v212, %v210
  %v225 = vpack.c.bf16 %v215, %v213
  %v226 = vpack.c.bf16 %v216, %v214
  %v227 = vpack.c.bf16 %v219, %v217
  %v228 = vpack.c.bf16 %v220, %v218
  %v229 = vld [vmem:[%s3] sm:$0xff]
  %v230 = vld [vmem:[%s3 + $0x8] sm:$0xff]
  %v231 = vld [vmem:[%s3 + $0x10] sm:$0xff]
  %v232 = vld [vmem:[%s3 + $0x18] sm:$0xff]
  %v233 = vld [vmem:[%s3 + $0x20] sm:$0xff]
  %v234 = vld [vmem:[%s3 + $0x28] sm:$0xff]
  %v235 = vld [vmem:[%s3 + $0x30] sm:$0xff]
  %v236 = vld [vmem:[%s3 + $0x38] sm:$0xff]
  %v237 = vld [vmem:[%s3 + $0x40] sm:$0xff]
  %v238 = vld [vmem:[%s3 + $0x48] sm:$0xff]
  %v239 = vld [vmem:[%s3 + $0x50] sm:$0xff]
  %v240 = vld [vmem:[%s3 + $0x58] sm:$0xff]
  %v241 = vld [vmem:[%s3 + $0x60] sm:$0xff]
  %v242 = vld [vmem:[%s3 + $0x68] sm:$0xff]
  %v243 = vld [vmem:[%s3 + $0x70] sm:$0xff]
  %v244 = vld [vmem:[%s3 + $0x78] sm:$0xff]
  %v245 = vld [vmem:[%s3 + $0x80] sm:$0xff]
  %v246 = vld [vmem:[%s3 + $0x88] sm:$0xff]
  %v247 = vld [vmem:[%s3 + $0x90] sm:$0xff]
  %v248 = vld [vmem:[%s3 + $0x98] sm:$0xff]
  %v249 = vld [vmem:[%s3 + $0xa0] sm:$0xff]
  %v250 = vld [vmem:[%s3 + $0xa8] sm:$0xff]
  %v251 = vld [vmem:[%s3 + $0xb0] sm:$0xff]
  %v252 = vld [vmem:[%s3 + $0xb8] sm:$0xff]
  %v253 = vld [vmem:[%s3 + $0xc0] sm:$0xff]
  %v254 = vld [vmem:[%s3 + $0xc8] sm:$0xff]
  %v255 = vld [vmem:[%s3 + $0xd0] sm:$0xff]
  %v256 = vld [vmem:[%s3 + $0xd8] sm:$0xff]
  %v257 = vld [vmem:[%s3 + $0xe0] sm:$0xff]
  %v258 = vld [vmem:[%s3 + $0xe8] sm:$0xff]
  %v289 = vunpack.c.l.b16 %v229
  %v290 = vunpack.c.h.b16 %v229
  %v291 = vunpack.c.l.b16 %v230
  %v292 = vunpack.c.h.b16 %v230
  %v293 = vunpack.c.l.b16 %v231
  %v294 = vunpack.c.h.b16 %v231
  %v295 = vunpack.c.l.b16 %v232
  %v296 = vunpack.c.h.b16 %v232
  %v297 = vunpack.c.l.b16 %v233
  %v298 = vunpack.c.h.b16 %v233
  %v299 = vunpack.c.l.b16 %v234
  %v300 = vunpack.c.h.b16 %v234
  %v301 = vunpack.c.l.b16 %v235
  %v302 = vunpack.c.h.b16 %v235
  %v303 = vunpack.c.l.b16 %v236
  %v304 = vunpack.c.h.b16 %v236
  %v305 = vunpack.c.l.b16 %v237
  %v306 = vunpack.c.h.b16 %v237
  %v307 = vunpack.c.l.b16 %v238
  %v308 = vunpack.c.h.b16 %v238
  %v309 = vunpack.c.l.b16 %v239
  %v310 = vunpack.c.h.b16 %v239
  %v311 = vunpack.c.l.b16 %v240
  %v312 = vunpack.c.h.b16 %v240
  %v313 = vunpack.c.l.b16 %v241
  %v314 = vunpack.c.h.b16 %v241
  %v315 = vunpack.c.l.b16 %v242
  %v316 = vunpack.c.h.b16 %v242
  %v317 = vunpack.c.l.b16 %v243
  %v318 = vunpack.c.h.b16 %v243
  %v319 = vunpack.c.l.b16 %v244
  %v320 = vunpack.c.h.b16 %v244
  %v321 = vunpack.c.l.b16 %v245
  %v322 = vunpack.c.h.b16 %v245
  %v323 = vunpack.c.l.b16 %v246
  %v324 = vunpack.c.h.b16 %v246
  %v325 = vunpack.c.l.b16 %v247
  %v326 = vunpack.c.h.b16 %v247
  %v327 = vunpack.c.l.b16 %v248
  %v328 = vunpack.c.h.b16 %v248
  %v329 = vunpack.c.l.b16 %v249
  %v330 = vunpack.c.h.b16 %v249
  %v331 = vunpack.c.l.b16 %v250
  %v332 = vunpack.c.h.b16 %v250
  %v333 = vunpack.c.l.b16 %v251
  %v334 = vunpack.c.h.b16 %v251
  %v335 = vunpack.c.l.b16 %v252
  %v336 = vunpack.c.h.b16 %v252
  %v337 = vunpack.c.l.b16 %v253
  %v338 = vunpack.c.h.b16 %v253
  %v339 = vunpack.c.l.b16 %v254
  %v340 = vunpack.c.h.b16 %v254
  %v341 = vunpack.c.l.b16 %v255
  %v342 = vunpack.c.h.b16 %v255
  %v343 = vunpack.c.l.b16 %v256
  %v344 = vunpack.c.h.b16 %v256
  %v345 = vunpack.c.l.b16 %v257
  %v346 = vunpack.c.h.b16 %v257
  %v347 = vunpack.c.l.b16 %v258
  %v348 = vunpack.c.h.b16 %v258
  %v349 = vpack.c.b16 %v291, %v289
  %v350 = vpack.c.b16 %v292, %v290
  %v351 = vpack.c.b16 %v295, %v293
  %v352 = vpack.c.b16 %v296, %v294
  %v353 = vpack.c.b16 %v299, %v297
  %v354 = vpack.c.b16 %v300, %v298
  %v355 = vpack.c.b16 %v303, %v301
  %v356 = vpack.c.b16 %v304, %v302
  %v357 = vpack.c.b16 %v307, %v305
  %v358 = vpack.c.b16 %v308, %v306
  %v359 = vpack.c.b16 %v311, %v309
  %v360 = vpack.c.b16 %v312, %v310
  %v361 = vpack.c.b16 %v315, %v313
  %v362 = vpack.c.b16 %v316, %v314
  %v363 = vpack.c.b16 %v319, %v317
  %v364 = vpack.c.b16 %v320, %v318
  %v365 = vpack.c.b16 %v323, %v321
  %v366 = vpack.c.b16 %v324, %v322
  %v367 = vpack.c.b16 %v327, %v325
  %v368 = vpack.c.b16 %v328, %v326
  %v369 = vpack.c.b16 %v331, %v329
  %v370 = vpack.c.b16 %v332, %v330
  %v371 = vpack.c.b16 %v335, %v333
  %v372 = vpack.c.b16 %v336, %v334
  %v373 = vpack.c.b16 %v339, %v337
  %v374 = vpack.c.b16 %v340, %v338
  %v375 = vpack.c.b16 %v343, %v341
  %v376 = vpack.c.b16 %v344, %v342
  %v377 = vpack.c.b16 %v347, %v345
  %v378 = vpack.c.b16 %v348, %v346
  %vm409 = vcmask 916480
  %v411 = vsel %vm409, %v222, 0
  %v414 = vsel %vm409, %v224, 0
  %v417 = vsel %vm409, %v226, 0
  %v420 = vsel %vm409, %v228, 0
  %422 = vmatprep.subr.bf16.mxu0 %v350
  %423 = vmatpush1.bf16.msra.mxu0 %v349
  %424 = vmatprep.subr.bf16.mxu0 %v352
  %425 = vmatpush1.bf16.msra.mxu0 %v351
  %426 = vmatprep.subr.bf16.mxu0 %v354
  %427 = vmatpush1.bf16.msra.mxu0 %v353
  %428 = vmatprep.subr.bf16.mxu0 %v356
  %429 = vmatpush1.bf16.msra.mxu0 %v355
  %430 = vmatprep.subr.bf16.mxu0 %v358
  %431 = vmatpush1.bf16.msra.mxu0 %v357
  %432 = vmatprep.subr.bf16.mxu0 %v360
  %433 = vmatpush1.bf16.msra.mxu0 %v359
  %434 = vmatprep.subr.bf16.mxu0 %v362
  %435 = vmatpush1.bf16.msra.mxu0 %v361
  %436 = vmatprep.subr.bf16.mxu0 %v364
  %437 = vmatpush1.bf16.msra.mxu0 %v363
  %438 = vmatprep.subr.bf16.mxu0 %v366
  %439 = vmatpush1.bf16.msra.mxu0 %v365
  %440 = vmatprep.subr.bf16.mxu0 %v368
  %441 = vmatpush1.bf16.msra.mxu0 %v367
  %442 = vmatprep.subr.bf16.mxu0 %v370
  %443 = vmatpush1.bf16.msra.mxu0 %v369
  %444 = vmatprep.subr.bf16.mxu0 %v372
  %445 = vmatpush1.bf16.msra.mxu0 %v371
  %446 = vmatprep.subr.bf16.mxu0 %v374
  %447 = vmatpush1.bf16.msra.mxu0 %v373
  %448 = vmatprep.subr.bf16.mxu0 %v376
  %449 = vmatpush1.bf16.msra.mxu0 %v375
  %450 = vmatprep.subr.bf16.mxu0 %v378
  %451 = vmatpush1.bf16.msra.mxu0 %v377
  %452 = vmatprep.subr.bf16.mxu0 0
  %453 = vmatpush1.bf16.msra.mxu0 0
  %454 = vmatprep.mubr.bf16.mxu0 %v411
  %455 = vmatmul.mubr.bf16.gmra.mrb[0].mxu0 %v221
  %v456 = vpop.f32.mrb[0].mxu0
  %v457 = vadd.f32 0.0, %v456
  %v458 = vpop.f32.mrb[0].mxu0
  %v459 = vadd.f32 0.0, %v458
  %v460 = vpop.f32.mrb[0].mxu0
  %v461 = vadd.f32 0.0, %v460
  %v462 = vpop.f32.mrb[0].mxu0
  %v463 = vadd.f32 0.0, %v462
  %464 = vmatprep.mubr.bf16.mxu0 %v414
  %465 = vmatmul.mubr.bf16.gmra.mrb[0].mxu0 %v223
  %v466 = vpop.f32.mrb[0].mxu0
  %v467 = vadd.f32 0.0, %v466
  %v468 = vpop.f32.mrb[0].mxu0
  %v469 = vadd.f32 0.0, %v468
  %v470 = vpop.f32.mrb[0].mxu0
  %v471 = vadd.f32 0.0, %v470
  %v472 = vpop.f32.mrb[0].mxu0
  %v473 = vadd.f32 0.0, %v472
  %474 = vmatprep.mubr.bf16.mxu0 %v417
  %475 = vmatmul.mubr.bf16.gmra.mrb[0].mxu0 %v225
  %v476 = vpop.f32.mrb[0].mxu0
  %v477 = vadd.f32 0.0, %v476
  %v478 = vpop.f32.mrb[0].mxu0
  %v479 = vadd.f32 0.0, %v478
  %v480 = vpop.f32.mrb[0].mxu0
  %v481 = vadd.f32 0.0, %v480
  %v482 = vpop.f32.mrb[0].mxu0
  %v483 = vadd.f32 0.0, %v482
  %484 = vmatprep.mubr.bf16.mxu0 %v420
  %485 = vmatmul.mubr.bf16.gmra.mrb[0].mxu0 %v227
  %v486 = vpop.f32.mrb[0].mxu0
  %v487 = vadd.f32 0.0, %v486
  %v488 = vpop.f32.mrb[0].mxu0
  %v489 = vadd.f32 0.0, %v488
  %v490 = vpop.f32.mrb[0].mxu0
  %v491 = vadd.f32 0.0, %v490
  %v492 = vpop.f32.mrb[0].mxu0
  %v493 = vadd.f32 0.0, %v492
  %494 = vdwg.mxu0
  %v495 = vpack.c.bf16 %v461, %v457
  %v496 = vpack.c.bf16 %v463, %v459
  %v497 = vpack.c.bf16 %v471, %v467
  %v498 = vpack.c.bf16 %v473, %v469
  %v499 = vpack.c.bf16 %v481, %v477
  %v500 = vpack.c.bf16 %v483, %v479
  %v501 = vpack.c.bf16 %v491, %v487
  %v502 = vpack.c.bf16 %v493, %v489
  %v503 = vld [vmem:[%s4] sm:$0x3]
  %v506 = vunpack.c.l.s4 1966171168
  %v507 = vunpack.c.0.s8 %v506
  %v508 = vlaneseq
  %v509 = vshrl.u32 %v508, 7
  %v510 = vsub.s32 %v507, %v509
  %v511 = vrot.slane %v503, %v510
  %v512 = vcombine.high %v511, %v511
  %v514 = vunpack.c.l.s4 1966171168
  %v515 = vunpack.c.0.s8 %v514
  %v516 = vlaneseq
  %v517 = vshrl.u32 %v516, 7
  %v518 = vsub.s32 %v515, %v517
  %v519 = vrot.slane %v511, %v518
  %v521 = vunpack.c.l.s4 1966171168
  %v522 = vunpack.c.0.s8 %v521
  %v523 = vlaneseq
  %v524 = vshrl.u32 %v523, 7
  %v525 = vsub.s32 %v522, %v524
  %v526 = vrot.slane %v512, %v525
  %v528 = vpack.i.b16 %v519, %v519
  %v530 = vlaneseq
  %v531 = vshrl.u32 %v530, 7
  %v532 = vsub.s32 0, %v531
  %v533 = vrot.slane %v528, %v532
  %v535 = vpack.i.b16 %v526, %v526
  %v537 = vlaneseq
  %v538 = vshrl.u32 %v537, 7
  %v539 = vsub.s32 0, %v538
  %v540 = vrot.slane %v535, %v539
  %v541 = vadd.bf16 %v495, %v533
  %v542 = vadd.bf16 %v496, %v540
  %v543 = vadd.bf16 %v497, %v533
  %v544 = vadd.bf16 %v498, %v540
  %v545 = vadd.bf16 %v499, %v533
  %v546 = vadd.bf16 %v500, %v540
  %v547 = vadd.bf16 %v501, %v533
  %v548 = vadd.bf16 %v502, %v540
  %v549 = vmax.bf16 %v541, 0
  %v550 = vmax.bf16 %v542, 0
  %v551 = vmax.bf16 %v543, 0
  %v552 = vmax.bf16 %v544, 0
  %v553 = vmax.bf16 %v545, 0
  %v554 = vmax.bf16 %v546, 0
  %v555 = vmax.bf16 %v547, 0
  %v556 = vmax.bf16 %v548, 0
  %v557 = vld [vmem:[%s5] sm:$0xff]
  %v558 = vld [vmem:[%s5 + $0x8] sm:$0xff]
  %v559 = vld [vmem:[%s5 + $0x10] sm:$0xff]
  %v560 = vld [vmem:[%s5 + $0x18] sm:$0xff]
  %v561 = vld [vmem:[%s5 + $0x20] sm:$0xff]
  %v562 = vld [vmem:[%s5 + $0x28] sm:$0xff]
  %v563 = vld [vmem:[%s5 + $0x30] sm:$0xff]
  %v564 = vld [vmem:[%s5 + $0x38] sm:$0xff]
  %v565 = vld [vmem:[%s5 + $0x40] sm:$0xff]
  %v566 = vld [vmem:[%s5 + $0x48] sm:$0xff]
  %v567 = vld [vmem:[%s5 + $0x50] sm:$0xff]
  %v568 = vld [vmem:[%s5 + $0x58] sm:$0xff]
  %v569 = vld [vmem:[%s5 + $0x60] sm:$0xff]
  %v570 = vld [vmem:[%s5 + $0x68] sm:$0xff]
  %v571 = vld [vmem:[%s5 + $0x70] sm:$0xff]
  %v572 = vld [vmem:[%s5 + $0x78] sm:$0xff]
  %v573 = vld [vmem:[%s5 + $0x80] sm:$0xff]
  %v574 = vld [vmem:[%s5 + $0x88] sm:$0xff]
  %v575 = vld [vmem:[%s5 + $0x90] sm:$0xff]
  %v576 = vld [vmem:[%s5 + $0x98] sm:$0xff]
  %v577 = vld [vmem:[%s5 + $0xa0] sm:$0xff]
  %v578 = vld [vmem:[%s5 + $0xa8] sm:$0xff]
  %v579 = vld [vmem:[%s5 + $0xb0] sm:$0xff]
  %v580 = vld [vmem:[%s5 + $0xb8] sm:$0xff]
  %v581 = vld [vmem:[%s5 + $0xc0] sm:$0xff]
  %v607 = vunpack.c.l.b16 %v557
  %v608 = vunpack.c.h.b16 %v557
  %v609 = vunpack.c.l.b16 %v558
  %v610 = vunpack.c.h.b16 %v558
  %v611 = vunpack.c.l.b16 %v559
  %v612 = vunpack.c.h.b16 %v559
  %v613 = vunpack.c.l.b16 %v560
  %v614 = vunpack.c.h.b16 %v560
  %v615 = vunpack.c.l.b16 %v561
  %v616 = vunpack.c.h.b16 %v561
  %v617 = vunpack.c.l.b16 %v562
  %v618 = vunpack.c.h.b16 %v562
  %v619 = vunpack.c.l.b16 %v563
  %v620 = vunpack.c.h.b16 %v563
  %v621 = vunpack.c.l.b16 %v564
  %v622 = vunpack.c.h.b16 %v564
  %v623 = vunpack.c.l.b16 %v565
  %v624 = vunpack.c.h.b16 %v565
  %v625 = vunpack.c.l.b16 %v566
  %v626 = vunpack.c.h.b16 %v566
  %v627 = vunpack.c.l.b16 %v567
  %v628 = vunpack.c.h.b16 %v567
  %v629 = vunpack.c.l.b16 %v568
  %v630 = vunpack.c.h.b16 %v568
  %v631 = vunpack.c.l.b16 %v569
  %v632 = vunpack.c.h.b16 %v569
  %v633 = vunpack.c.l.b16 %v570
  %v634 = vunpack.c.h.b16 %v570
  %v635 = vunpack.c.l.b16 %v571
  %v636 = vunpack.c.h.b16 %v571
  %v637 = vunpack.c.l.b16 %v572
  %v638 = vunpack.c.h.b16 %v572
  %v639 = vunpack.c.l.b16 %v573
  %v640 = vunpack.c.h.b16 %v573
  %v641 = vunpack.c.l.b16 %v574
  %v642 = vunpack.c.h.b16 %v574
  %v643 = vunpack.c.l.b16 %v575
  %v644 = vunpack.c.h.b16 %v575
  %v645 = vunpack.c.l.b16 %v576
  %v646 = vunpack.c.h.b16 %v576
  %v647 = vunpack.c.l.b16 %v577
  %v648 = vunpack.c.h.b16 %v577
  %v649 = vunpack.c.l.b16 %v578
  %v650 = vunpack.c.h.b16 %v578
  %v651 = vunpack.c.l.b16 %v579
  %v652 = vunpack.c.h.b16 %v579
  %v653 = vunpack.c.l.b16 %v580
  %v654 = vunpack.c.h.b16 %v580
  %v655 = vunpack.c.l.b16 %v581
  %v656 = vunpack.c.h.b16 %v581
  %v657 = vpack.c.b16 %v609, %v607
  %v658 = vpack.c.b16 %v610, %v608
  %v659 = vpack.c.b16 %v613, %v611
  %v660 = vpack.c.b16 %v614, %v612
  %v661 = vpack.c.b16 %v617, %v615
  %v662 = vpack.c.b16 %v618, %v616
  %v663 = vpack.c.b16 %v621, %v619
  %v664 = vpack.c.b16 %v622, %v620
  %v665 = vpack.c.b16 %v625, %v623
  %v666 = vpack.c.b16 %v626, %v624
  %v667 = vpack.c.b16 %v629, %v627
  %v668 = vpack.c.b16 %v630, %v628
  %v669 = vpack.c.b16 %v633, %v631
  %v670 = vpack.c.b16 %v634, %v632
  %v671 = vpack.c.b16 %v637, %v635
  %v672 = vpack.c.b16 %v638, %v636
  %v673 = vpack.c.b16 %v641, %v639
  %v674 = vpack.c.b16 %v642, %v640
  %v675 = vpack.c.b16 %v645, %v643
  %v676 = vpack.c.b16 %v646, %v644
  %v677 = vpack.c.b16 %v649, %v647
  %v678 = vpack.c.b16 %v650, %v648
  %v679 = vpack.c.b16 %v653, %v651
  %v680 = vpack.c.b16 %v654, %v652
  %v681 = vpack.c.b16 %v655, %v655
  %v682 = vpack.c.b16 %v656, %v656
  %vm707 = vcmask 588800
  %v709 = vsel %vm707, %v550, 0
  %v712 = vsel %vm707, %v552, 0
  %v715 = vsel %vm707, %v554, 0
  %v718 = vsel %vm707, %v556, 0
  %vm720 = vcmask 1043456
  %v722 = vsel %vm720, %v681, 0
  %v725 = vsel %vm720, %v682, 0
  %727 = vmatprep.subr.bf16.mxu0 %v658
  %728 = vmatpush1.bf16.msra.mxu0 %v657
  %729 = vmatprep.subr.bf16.mxu0 %v660
  %730 = vmatpush1.bf16.msra.mxu0 %v659
  %731 = vmatprep.subr.bf16.mxu0 %v662
  %732 = vmatpush1.bf16.msra.mxu0 %v661
  %733 = vmatprep.subr.bf16.mxu0 %v664
  %734 = vmatpush1.bf16.msra.mxu0 %v663
  %735 = vmatprep.subr.bf16.mxu0 %v666
  %736 = vmatpush1.bf16.msra.mxu0 %v665
  %737 = vmatprep.subr.bf16.mxu0 %v668
  %738 = vmatpush1.bf16.msra.mxu0 %v667
  %739 = vmatprep.subr.bf16.mxu0 %v670
  %740 = vmatpush1.bf16.msra.mxu0 %v669
  %741 = vmatprep.subr.bf16.mxu0 %v672
  %742 = vmatpush1.bf16.msra.mxu0 %v671
  %743 = vmatprep.subr.bf16.mxu0 %v674
  %744 = vmatpush1.bf16.msra.mxu0 %v673
  %745 = vmatprep.subr.bf16.mxu0 %v676
  %746 = vmatpush1.bf16.msra.mxu0 %v675
  %747 = vmatprep.subr.bf16.mxu0 %v678
  %748 = vmatpush1.bf16.msra.mxu0 %v677
  %749 = vmatprep.subr.bf16.mxu0 %v680
  %750 = vmatpush1.bf16.msra.mxu0 %v679
  %751 = vmatprep.subr.bf16.mxu0 %v725
  %752 = vmatpush1.bf16.msra.mxu0 %v722
  %753 = vmatprep.subr.bf16.mxu0 0
  %754 = vmatpush1.bf16.msra.mxu0 0
  %755 = vmatprep.subr.bf16.mxu0 0
  %756 = vmatpush1.bf16.msra.mxu0 0
  %757 = vmatprep.subr.bf16.mxu0 0
  %758 = vmatpush1.bf16.msra.mxu0 0
  %759 = vmatprep.mubr.bf16.mxu0 %v709
  %760 = vmatmul.mubr.bf16.gmra.mrb[0].mxu0 %v549
  %v761 = vpop.f32.mrb[0].mxu0
  %v762 = vadd.f32 0.0, %v761
  %v763 = vpop.f32.mrb[0].mxu0
  %v764 = vadd.f32 0.0, %v763
  %v765 = vpop.f32.mrb[0].mxu0
  %v766 = vadd.f32 0.0, %v765
  %v767 = vpop.f32.mrb[0].mxu0
  %v768 = vadd.f32 0.0, %v767
  %769 = vmatprep.mubr.bf16.mxu0 %v712
  %770 = vmatmul.mubr.bf16.gmra.mrb[0].mxu0 %v551
  %v771 = vpop.f32.mrb[0].mxu0
  %v772 = vadd.f32 0.0, %v771
  %v773 = vpop.f32.mrb[0].mxu0
  %v774 = vadd.f32 0.0, %v773
  %v775 = vpop.f32.mrb[0].mxu0
  %v776 = vadd.f32 0.0, %v775
  %v777 = vpop.f32.mrb[0].mxu0
  %v778 = vadd.f32 0.0, %v777
  %779 = vmatprep.mubr.bf16.mxu0 %v715
  %780 = vmatmul.mubr.bf16.gmra.mrb[0].mxu0 %v553
  %v781 = vpop.f32.mrb[0].mxu0
  %v782 = vadd.f32 0.0, %v781
  %v783 = vpop.f32.mrb[0].mxu0
  %v784 = vadd.f32 0.0, %v783
  %v785 = vpop.f32.mrb[0].mxu0
  %v786 = vadd.f32 0.0, %v785
  %v787 = vpop.f32.mrb[0].mxu0
  %v788 = vadd.f32 0.0, %v787
  %789 = vmatprep.mubr.bf16.mxu0 %v718
  %790 = vmatmul.mubr.bf16.gmra.mrb[0].mxu0 %v555
  %v791 = vpop.f32.mrb[0].mxu0
  %v792 = vadd.f32 0.0, %v791
  %v793 = vpop.f32.mrb[0].mxu0
  %v794 = vadd.f32 0.0, %v793
  %v795 = vpop.f32.mrb[0].mxu0
  %v796 = vadd.f32 0.0, %v795
  %v797 = vpop.f32.mrb[0].mxu0
  %v798 = vadd.f32 0.0, %v797
  %799 = vdwg.mxu0
  %v800 = vpack.c.bf16 %v766, %v762
  %v801 = vpack.c.bf16 %v768, %v764
  %v802 = vpack.c.bf16 %v776, %v772
  %v803 = vpack.c.bf16 %v778, %v774
  %v804 = vpack.c.bf16 %v786, %v782
  %v805 = vpack.c.bf16 %v788, %v784
  %v806 = vpack.c.bf16 %v796, %v792
  %v807 = vpack.c.bf16 %v798, %v794
  %v808 = vld [vmem:[%s6] sm:$0x3]
  %v811 = vunpack.c.l.s4 1966171168
  %v812 = vunpack.c.0.s8 %v811
  %v813 = vlaneseq
  %v814 = vshrl.u32 %v813, 7
  %v815 = vsub.s32 %v812, %v814
  %v816 = vrot.slane %v808, %v815
  %v817 = vcombine.high %v816, %v816
  %v819 = vunpack.c.l.s4 1966171168
  %v820 = vunpack.c.0.s8 %v819
  %v821 = vlaneseq
  %v822 = vshrl.u32 %v821, 7
  %v823 = vsub.s32 %v820, %v822
  %v824 = vrot.slane %v816, %v823
  %v826 = vunpack.c.l.s4 1966171168
  %v827 = vunpack.c.0.s8 %v826
  %v828 = vlaneseq
  %v829 = vshrl.u32 %v828, 7
  %v830 = vsub.s32 %v827, %v829
  %v831 = vrot.slane %v817, %v830
  %v833 = vpack.i.b16 %v824, %v824
  %v835 = vlaneseq
  %v836 = vshrl.u32 %v835, 7
  %v837 = vsub.s32 0, %v836
  %v838 = vrot.slane %v833, %v837
  %v840 = vpack.i.b16 %v831, %v831
  %v842 = vlaneseq
  %v843 = vshrl.u32 %v842, 7
  %v844 = vsub.s32 0, %v843
  %v845 = vrot.slane %v840, %v844
  %v846 = vadd.bf16 %v800, %v838
  %v847 = vadd.bf16 %v801, %v845
  %v848 = vadd.bf16 %v802, %v838
  %v849 = vadd.bf16 %v803, %v845
  %v850 = vadd.bf16 %v804, %v838
  %v851 = vadd.bf16 %v805, %v845
  %v852 = vadd.bf16 %v806, %v838
  %v853 = vadd.bf16 %v807, %v845
  %v854 = vmax.bf16 %v846, 0
  %v855 = vmax.bf16 %v847, 0
  %v856 = vmax.bf16 %v848, 0
  %v857 = vmax.bf16 %v849, 0
  %v858 = vmax.bf16 %v850, 0
  %v859 = vmax.bf16 %v851, 0
  %v860 = vmax.bf16 %v852, 0
  %v861 = vmax.bf16 %v853, 0
  %v862 = vld [vmem:[%s7] sm:$0xf]
  %v863 = vld [vmem:[%s7 + $0x4] sm:$0xf]
  %v864 = vld [vmem:[%s7 + $0x8] sm:$0xf]
  %v865 = vld [vmem:[%s7 + $0xc] sm:$0xf]
  %v866 = vld [vmem:[%s7 + $0x10] sm:$0xf]
  %v867 = vld [vmem:[%s7 + $0x14] sm:$0xf]
  %v868 = vld [vmem:[%s7 + $0x18] sm:$0xf]
  %v869 = vld [vmem:[%s7 + $0x1c] sm:$0xf]
  %v870 = vld [vmem:[%s7 + $0x20] sm:$0xf]
  %v871 = vld [vmem:[%s7 + $0x24] sm:$0xf]
  %v872 = vld [vmem:[%s7 + $0x28] sm:$0xf]
  %v873 = vld [vmem:[%s7 + $0x2c] sm:$0xf]
  %v874 = vld [vmem:[%s7 + $0x30] sm:$0xf]
  %v875 = vld [vmem:[%s7 + $0x34] sm:$0xf]
  %v876 = vld [vmem:[%s7 + $0x38] sm:$0xf]
  %v877 = vld [vmem:[%s7 + $0x3c] sm:$0xf]
  %v878 = vld [vmem:[%s7 + $0x40] sm:$0xf]
  %v879 = vld [vmem:[%s7 + $0x44] sm:$0x3]
  %v898 = vunpack.c.l.b16 %v862
  %v899 = vunpack.c.l.b16 %v863
  %v900 = vunpack.c.l.b16 %v864
  %v901 = vunpack.c.l.b16 %v865
  %v902 = vunpack.c.l.b16 %v866
  %v903 = vunpack.c.l.b16 %v867
  %v904 = vunpack.c.l.b16 %v868
  %v905 = vunpack.c.l.b16 %v869
  %v906 = vunpack.c.l.b16 %v870
  %v907 = vunpack.c.l.b16 %v871
  %v908 = vunpack.c.l.b16 %v872
  %v909 = vunpack.c.l.b16 %v873
  %v910 = vunpack.c.l.b16 %v874
  %v911 = vunpack.c.l.b16 %v875
  %v912 = vunpack.c.l.b16 %v876
  %v913 = vunpack.c.l.b16 %v877
  %v914 = vunpack.c.l.b16 %v878
  %v915 = vunpack.c.l.b16 %v879
  %v916 = vpack.c.b16 %v899, %v898
  %v917 = vpack.c.b16 %v901, %v900
  %v918 = vpack.c.b16 %v903, %v902
  %v919 = vpack.c.b16 %v905, %v904
  %v920 = vpack.c.b16 %v907, %v906
  %v921 = vpack.c.b16 %v909, %v908
  %v922 = vpack.c.b16 %v911, %v910
  %v923 = vpack.c.b16 %v913, %v912
  %v924 = vpack.c.b16 %v915, %v914
  %vm933 = vcmask 97280
  %v935 = vsel %vm933, %v855, 0
  %v938 = vsel %vm933, %v857, 0
  %v941 = vsel %vm933, %v859, 0
  %v944 = vsel %vm933, %v861, 0
  %v947 = vsel %vm123, %v924, 0
  %949 = vmatprep.subr.bf16.mxu0 0
  %950 = vmatpush1.bf16.msra.mxu0 %v916
  %951 = vmatprep.subr.bf16.mxu0 0
  %952 = vmatpush1.bf16.msra.mxu0 %v917
  %953 = vmatprep.subr.bf16.mxu0 0
  %954 = vmatpush1.bf16.msra.mxu0 %v918
  %955 = vmatprep.subr.bf16.mxu0 0
  %956 = vmatpush1.bf16.msra.mxu0 %v919
  %957 = vmatprep.subr.bf16.mxu0 0
  %958 = vmatpush1.bf16.msra.mxu0 %v920
  %959 = vmatprep.subr.bf16.mxu0 0
  %960 = vmatpush1.bf16.msra.mxu0 %v921
  %961 = vmatprep.subr.bf16.mxu0 0
  %962 = vmatpush1.bf16.msra.mxu0 %v922
  %963 = vmatprep.subr.bf16.mxu0 0
  %964 = vmatpush1.bf16.msra.mxu0 %v923
  %965 = vmatprep.subr.bf16.mxu0 0
  %966 = vmatpush1.bf16.msra.mxu0 %v947
  %967 = vmatprep.subr.bf16.mxu0 0
  %968 = vmatpush1.bf16.msra.mxu0 0
  %969 = vmatprep.subr.bf16.mxu0 0
  %970 = vmatpush1.bf16.msra.mxu0 0
  %971 = vmatprep.subr.bf16.mxu0 0
  %972 = vmatpush1.bf16.msra.mxu0 0
  %973 = vmatprep.subr.bf16.mxu0 0
  %974 = vmatpush1.bf16.msra.mxu0 0
  %975 = vmatprep.subr.bf16.mxu0 0
  %976 = vmatpush1.bf16.msra.mxu0 0
  %977 = vmatprep.subr.bf16.mxu0 0
  %978 = vmatpush1.bf16.msra.mxu0 0
  %979 = vmatprep.subr.bf16.mxu0 0
  %980 = vmatpush1.bf16.msra.mxu0 0
  %981 = vmatprep.mubr.bf16.mxu0 %v935
  %982 = vmatmul.mubr.bf16.gmra.mrb[0].mxu0 %v854
  %v983 = vpop.f32.mrb[0].mxu0
  %v984 = vadd.f32 0.0, %v983
  %v985 = vpop.f32.mrb[0].mxu0
  %v986 = vpop.f32.mrb[0].mxu0
  %v987 = vadd.f32 0.0, %v986
  %v988 = vpop.f32.mrb[0].mxu0
  %989 = vmatprep.mubr.bf16.mxu0 %v938
  %990 = vmatmul.mubr.bf16.gmra.mrb[0].mxu0 %v856
  %v991 = vpop.f32.mrb[0].mxu0
  %v992 = vadd.f32 0.0, %v991
  %v993 = vpop.f32.mrb[0].mxu0
  %v994 = vpop.f32.mrb[0].mxu0
  %v995 = vadd.f32 0.0, %v994
  %v996 = vpop.f32.mrb[0].mxu0
  %997 = vmatprep.mubr.bf16.mxu0 %v941
  %998 = vmatmul.mubr.bf16.gmra.mrb[0].mxu0 %v858
  %v999 = vpop.f32.mrb[0].mxu0
  %v1000 = vadd.f32 0.0, %v999
  %v1001 = vpop.f32.mrb[0].mxu0
  %v1002 = vpop.f32.mrb[0].mxu0
  %v1003 = vadd.f32 0.0, %v1002
  %v1004 = vpop.f32.mrb[0].mxu0
  %1005 = vmatprep.mubr.bf16.mxu0 %v944
  %1006 = vmatmul.mubr.bf16.gmra.mrb[0].mxu0 %v860
  %v1007 = vpop.f32.mrb[0].mxu0
  %v1008 = vadd.f32 0.0, %v1007
  %v1009 = vpop.f32.mrb[0].mxu0
  %v1010 = vpop.f32.mrb[0].mxu0
  %v1011 = vadd.f32 0.0, %v1010
  %v1012 = vpop.f32.mrb[0].mxu0
  %1013 = vdwg.mxu0
  %v1014 = vpack.c.bf16 %v987, %v984
  %v1015 = vpack.c.bf16 %v995, %v992
  %v1016 = vpack.c.bf16 %v1003, %v1000
  %v1017 = vpack.c.bf16 %v1011, %v1008
  %v1018 = vld [vmem:[%s8] sm:$0x1]
  %v1020 = vpack.i.b16 %v1018, %v1018
  %v1022 = vlaneseq
  %v1023 = vshrl.u32 %v1022, 7
  %v1024 = vsub.s32 0, %v1023
  %v1025 = vrot.slane %v1020, %v1024
  %v1026 = vadd.bf16 %v1014, %v1025
  %v1027 = vadd.bf16 %v1015, %v1025
  %v1028 = vadd.bf16 %v1016, %v1025
  %v1029 = vadd.bf16 %v1017, %v1025
  %v1030 = vmax.bf16 %v1026, 0
  %v1031 = vmax.bf16 %v1027, 0
  %v1032 = vmax.bf16 %v1028, 0
  %v1033 = vmax.bf16 %v1029, 0
  %v1034 = vld [vmem:[%s9] sm:$0xf]
  %v1035 = vld [vmem:[%s9 + $0x4] sm:$0xf]
  %v1036 = vld [vmem:[%s9 + $0x8] sm:$0xf]
  %v1037 = vld [vmem:[%s9 + $0xc] sm:$0xf]
  %v1038 = vld [vmem:[%s9 + $0x10] sm:$0xf]
  %v1039 = vld [vmem:[%s9 + $0x14] sm:$0xf]
  %v1040 = vld [vmem:[%s9 + $0x18] sm:$0xf]
  %v1041 = vld [vmem:[%s9 + $0x1c] sm:$0xf]
  %v1042 = vld [vmem:[%s9 + $0x20] sm:$0xf]
  %v1043 = vld [vmem:[%s9 + $0x24] sm:$0xf]
  %v1044 = vld [vmem:[%s9 + $0x28] sm:$0xf]
  %v1045 = vld [vmem:[%s9 + $0x2c] sm:$0xf]
  %v1046 = vld [vmem:[%s9 + $0x30] sm:$0x3]
  %v1060 = vunpack.c.l.b16 %v1034
  %v1061 = vunpack.c.l.b16 %v1035
  %v1062 = vunpack.c.l.b16 %v1036
  %v1063 = vunpack.c.l.b16 %v1037
  %v1064 = vunpack.c.l.b16 %v1038
  %v1065 = vunpack.c.l.b16 %v1039
  %v1066 = vunpack.c.l.b16 %v1040
  %v1067 = vunpack.c.l.b16 %v1041
  %v1068 = vunpack.c.l.b16 %v1042
  %v1069 = vunpack.c.l.b16 %v1043
  %v1070 = vunpack.c.l.b16 %v1044
  %v1071 = vunpack.c.l.b16 %v1045
  %v1072 = vunpack.c.l.b16 %v1046
  %v1073 = vpack.c.b16 %v1061, %v1060
  %v1074 = vpack.c.b16 %v1063, %v1062
  %v1075 = vpack.c.b16 %v1065, %v1064
  %v1076 = vpack.c.b16 %v1067, %v1066
  %v1077 = vpack.c.b16 %v1069, %v1068
  %v1078 = vpack.c.b16 %v1071, %v1070
  %v1079 = vpack.c.b16 %v1072, %v1072
  %vm1086 = vcmask 818176
  %v1088 = vsel %vm1086, %v1030, 0
  %v1091 = vsel %vm1086, %v1031, 0
  %v1094 = vsel %vm1086, %v1032, 0
  %v1097 = vsel %vm1086, %v1033, 0
  %vm1099 = vcmask 1041408
  %v1101 = vsel %vm1099, %v1079, 0
  %1103 = vmatprep.subr.bf16.mxu0 0
  %1104 = vmatpush1.bf16.msra.mxu0 %v1073
  %1105 = vmatprep.subr.bf16.mxu0 0
  %1106 = vmatpush1.bf16.msra.mxu0 %v1074
  %1107 = vmatprep.subr.bf16.mxu0 0
  %1108 = vmatpush1.bf16.msra.mxu0 %v1075
  %1109 = vmatprep.subr.bf16.mxu0 0
  %1110 = vmatpush1.bf16.msra.mxu0 %v1076
  %1111 = vmatprep.subr.bf16.mxu0 0
  %1112 = vmatpush1.bf16.msra.mxu0 %v1077
  %1113 = vmatprep.subr.bf16.mxu0 0
  %1114 = vmatpush1.bf16.msra.mxu0 %v1078
  %1115 = vmatprep.subr.bf16.mxu0 0
  %1116 = vmatpush1.bf16.msra.mxu0 %v1101
  %1117 = vmatprep.subr.bf16.mxu0 0
  %1118 = vmatpush1.bf16.msra.mxu0 0
  %1119 = vmatprep.subr.bf16.mxu0 0
  %1120 = vmatpush1.bf16.msra.mxu0 0
  %1121 = vmatprep.subr.bf16.mxu0 0
  %1122 = vmatpush1.bf16.msra.mxu0 0
  %1123 = vmatprep.subr.bf16.mxu0 0
  %1124 = vmatpush1.bf16.msra.mxu0 0
  %1125 = vmatprep.subr.bf16.mxu0 0
  %1126 = vmatpush1.bf16.msra.mxu0 0
  %1127 = vmatprep.subr.bf16.mxu0 0
  %1128 = vmatpush1.bf16.msra.mxu0 0
  %1129 = vmatprep.subr.bf16.mxu0 0
  %1130 = vmatpush1.bf16.msra.mxu0 0
  %1131 = vmatprep.subr.bf16.mxu0 0
  %1132 = vmatpush1.bf16.msra.mxu0 0
  %1133 = vmatprep.subr.bf16.mxu0 0
  %1134 = vmatpush1.bf16.msra.mxu0 0
  %1135 = vmatprep.mubr.bf16.mxu0 0
  %1136 = vmatmul.mubr.bf16.gmra.mrb[0].mxu0 %v1088
  %v1137 = vpop.f32.mrb[0].mxu0
  %v1138 = vadd.f32 0.0, %v1137
  %v1139 = vpop.f32.mrb[0].mxu0
  %v1140 = vpop.f32.mrb[0].mxu0
  %v1141 = vadd.f32 0.0, %v1140
  %v1142 = vpop.f32.mrb[0].mxu0
  %1143 = vmatprep.mubr.bf16.mxu0 0
  %1144 = vmatmul.mubr.bf16.gmra.mrb[0].mxu0 %v1091
  %v1145 = vpop.f32.mrb[0].mxu0
  %v1146 = vadd.f32 0.0, %v1145
  %v1147 = vpop.f32.mrb[0].mxu0
  %v1148 = vpop.f32.mrb[0].mxu0
  %v1149 = vadd.f32 0.0, %v1148
  %v1150 = vpop.f32.mrb[0].mxu0
  %1151 = vmatprep.mubr.bf16.mxu0 0
  %1152 = vmatmul.mubr.bf16.gmra.mrb[0].mxu0 %v1094
  %v1153 = vpop.f32.mrb[0].mxu0
  %v1154 = vadd.f32 0.0, %v1153
  %v1155 = vpop.f32.mrb[0].mxu0
  %v1156 = vpop.f32.mrb[0].mxu0
  %v1157 = vadd.f32 0.0, %v1156
  %v1158 = vpop.f32.mrb[0].mxu0
  %1159 = vmatprep.mubr.bf16.mxu0 0
  %1160 = vmatmul.mubr.bf16.gmra.mrb[0].mxu0 %v1097
  %v1161 = vpop.f32.mrb[0].mxu0
  %v1162 = vadd.f32 0.0, %v1161
  %v1163 = vpop.f32.mrb[0].mxu0
  %v1164 = vpop.f32.mrb[0].mxu0
  %v1165 = vadd.f32 0.0, %v1164
  %v1166 = vpop.f32.mrb[0].mxu0
  %1167 = vdwg.mxu0
  %v1168 = vpack.c.bf16 %v1141, %v1138
  %v1169 = vpack.c.bf16 %v1149, %v1146
  %v1170 = vpack.c.bf16 %v1157, %v1154
  %v1171 = vpack.c.bf16 %v1165, %v1162
  %v1172 = vld [vmem:[%s10] sm:$0x1]
  %v1174 = vpack.i.b16 %v1172, %v1172
  %v1176 = vlaneseq
  %v1177 = vshrl.u32 %v1176, 7
  %v1178 = vsub.s32 0, %v1177
  %v1179 = vrot.slane %v1174, %v1178
  %v1180 = vadd.bf16 %v1168, %v1179
  %v1181 = vadd.bf16 %v1169, %v1179
  %v1182 = vadd.bf16 %v1170, %v1179
  %v1183 = vadd.bf16 %v1171, %v1179
  %v1184 = vmax.bf16 %v1180, 0
  %v1185 = vmax.bf16 %v1181, 0
  %v1186 = vmax.bf16 %v1182, 0
  %v1187 = vmax.bf16 %v1183, 0
  %v1188 = vld [vmem:[%s11] sm:$0xf]
  %v1189 = vld [vmem:[%s11 + $0x4] sm:$0xf]
  %v1190 = vld [vmem:[%s11 + $0x8] sm:$0xf]
  %v1191 = vld [vmem:[%s11 + $0xc] sm:$0xf]
  %v1192 = vld [vmem:[%s11 + $0x10] sm:$0xf]
  %v1193 = vld [vmem:[%s11 + $0x14] sm:$0xf]
  %v1194 = vld [vmem:[%s11 + $0x18] sm:$0xf]
  %v1195 = vld [vmem:[%s11 + $0x1c] sm:$0x3]
  %v1204 = vunpack.c.l.b16 %v1188
  %v1205 = vunpack.c.l.b16 %v1189
  %v1206 = vunpack.c.l.b16 %v1190
  %v1207 = vunpack.c.l.b16 %v1191
  %v1208 = vunpack.c.l.b16 %v1192
  %v1209 = vunpack.c.l.b16 %v1193
  %v1210 = vunpack.c.l.b16 %v1194
  %v1211 = vunpack.c.l.b16 %v1195
  %v1212 = vpack.c.b16 %v1205, %v1204
  %v1213 = vpack.c.b16 %v1207, %v1206
  %v1214 = vpack.c.b16 %v1209, %v1208
  %v1215 = vpack.c.b16 %v1211, %v1210
  %vm1219 = vcmask 490496
  %v1221 = vsel %vm1219, %v1184, 0
  %v1224 = vsel %vm1219, %v1185, 0
  %v1227 = vsel %vm1219, %v1186, 0
  %v1230 = vsel %vm1219, %v1187, 0
  %v1233 = vsel %vm123, %v1215, 0
  %1235 = vmatprep.subr.bf16.mxu0 0
  %1236 = vmatpush1.bf16.msra.mxu0 %v1212
  %1237 = vmatprep.subr.bf16.mxu0 0
  %1238 = vmatpush1.bf16.msra.mxu0 %v1213
  %1239 = vmatprep.subr.bf16.mxu0 0
  %1240 = vmatpush1.bf16.msra.mxu0 %v1214
  %1241 = vmatprep.subr.bf16.mxu0 0
  %1242 = vmatpush1.bf16.msra.mxu0 %v1233
  %1243 = vmatprep.subr.bf16.mxu0 0
  %1244 = vmatpush1.bf16.msra.mxu0 0
  %1245 = vmatprep.subr.bf16.mxu0 0
  %1246 = vmatpush1.bf16.msra.mxu0 0
  %1247 = vmatprep.subr.bf16.mxu0 0
  %1248 = vmatpush1.bf16.msra.mxu0 0
  %1249 = vmatprep.subr.bf16.mxu0 0
  %1250 = vmatpush1.bf16.msra.mxu0 0
  %1251 = vmatprep.subr.bf16.mxu0 0
  %1252 = vmatpush1.bf16.msra.mxu0 0
  %1253 = vmatprep.subr.bf16.mxu0 0
  %1254 = vmatpush1.bf16.msra.mxu0 0
  %1255 = vmatprep.subr.bf16.mxu0 0
  %1256 = vmatpush1.bf16.msra.mxu0 0
  %1257 = vmatprep.subr.bf16.mxu0 0
  %1258 = vmatpush1.bf16.msra.mxu0 0
  %1259 = vmatprep.subr.bf16.mxu0 0
  %1260 = vmatpush1.bf16.msra.mxu0 0
  %1261 = vmatprep.subr.bf16.mxu0 0
  %1262 = vmatpush1.bf16.msra.mxu0 0
  %1263 = vmatprep.subr.bf16.mxu0 0
  %1264 = vmatpush1.bf16.msra.mxu0 0
  %1265 = vmatprep.subr.bf16.mxu0 0
  %1266 = vmatpush1.bf16.msra.mxu0 0
  %1267 = vmatprep.mubr.bf16.mxu0 0
  %1268 = vmatmul.mubr.bf16.gmra.mrb[0].mxu0 %v1221
  %v1269 = vpop.f32.mrb[0].mxu0
  %v1270 = vadd.f32 0.0, %v1269
  %v1271 = vpop.f32.mrb[0].mxu0
  %v1272 = vpop.f32.mrb[0].mxu0
  %v1273 = vadd.f32 0.0, %v1272
  %v1274 = vpop.f32.mrb[0].mxu0
  %1275 = vmatprep.mubr.bf16.mxu0 0
  %1276 = vmatmul.mubr.bf16.gmra.mrb[0].mxu0 %v1224
  %v1277 = vpop.f32.mrb[0].mxu0
  %v1278 = vadd.f32 0.0, %v1277
  %v1279 = vpop.f32.mrb[0].mxu0
  %v1280 = vpop.f32.mrb[0].mxu0
  %v1281 = vadd.f32 0.0, %v1280
  %v1282 = vpop.f32.mrb[0].mxu0
  %1283 = vmatprep.mubr.bf16.mxu0 0
  %1284 = vmatmul.mubr.bf16.gmra.mrb[0].mxu0 %v1227
  %v1285 = vpop.f32.mrb[0].mxu0
  %v1286 = vadd.f32 0.0, %v1285
  %v1287 = vpop.f32.mrb[0].mxu0
  %v1288 = vpop.f32.mrb[0].mxu0
  %v1289 = vadd.f32 0.0, %v1288
  %v1290 = vpop.f32.mrb[0].mxu0
  %1291 = vmatprep.mubr.bf16.mxu0 0
  %1292 = vmatmul.mubr.bf16.gmra.mrb[0].mxu0 %v1230
  %v1293 = vpop.f32.mrb[0].mxu0
  %v1294 = vadd.f32 0.0, %v1293
  %v1295 = vpop.f32.mrb[0].mxu0
  %v1296 = vpop.f32.mrb[0].mxu0
  %v1297 = vadd.f32 0.0, %v1296
  %v1298 = vpop.f32.mrb[0].mxu0
  %1299 = vdwg.mxu0
  %v1300 = vpack.c.bf16 %v1273, %v1270
  %v1301 = vpack.c.bf16 %v1281, %v1278
  %v1302 = vpack.c.bf16 %v1289, %v1286
  %v1303 = vpack.c.bf16 %v1297, %v1294
  %v1304 = vld [vmem:[%s12] sm:$0x1]
  %v1306 = vpack.i.b16 %v1304, %v1304
  %v1308 = vlaneseq
  %v1309 = vshrl.u32 %v1308, 7
  %v1310 = vsub.s32 0, %v1309
  %v1311 = vrot.slane %v1306, %v1310
  %v1312 = vadd.bf16 %v1300, %v1311
  %v1313 = vadd.bf16 %v1301, %v1311
  %v1314 = vadd.bf16 %v1302, %v1311
  %v1315 = vadd.bf16 %v1303, %v1311
  %v1316 = vmax.bf16 %v1312, 0
  %v1317 = vmax.bf16 %v1313, 0
  %v1318 = vmax.bf16 %v1314, 0
  %v1319 = vmax.bf16 %v1315, 0
  %v1320 = vld [vmem:[%s13] sm:$0xf]
  %v1321 = vld [vmem:[%s13 + $0x4] sm:$0xf]
  %v1322 = vld [vmem:[%s13 + $0x8] sm:$0xf]
  %v1323 = vld [vmem:[%s13 + $0xc] sm:$0xf]
  %v1324 = vld [vmem:[%s13 + $0x10] sm:$0xf]
  %v1325 = vld [vmem:[%s13 + $0x14] sm:$0x7]
  %v1332 = vunpack.c.l.b16 %v1320
  %v1333 = vunpack.c.l.b16 %v1321
  %v1334 = vunpack.c.l.b16 %v1322
  %v1335 = vunpack.c.l.b16 %v1323
  %v1336 = vunpack.c.l.b16 %v1324
  %v1337 = vunpack.c.l.b16 %v1325
  %v1338 = vpack.c.b16 %v1333, %v1332
  %v1339 = vpack.c.b16 %v1335, %v1334
  %v1340 = vpack.c.b16 %v1337, %v1336
  %vm1343 = vcmask 367616
  %v1345 = vsel %vm1343, %v1316, 0
  %v1348 = vsel %vm1343, %v1317, 0
  %v1351 = vsel %vm1343, %v1318, 0
  %v1354 = vsel %vm1343, %v1319, 0
  %vm1356 = vcmask 1046528
  %v1357 = vsel %vm123, 4294967295, 65535
  %v1358 = vsel %vm1356, %v1357, 0
  %v1360 = vand.u32 %v1340, %v1358
  %1362 = vmatprep.subr.bf16.mxu0 0
  %1363 = vmatpush1.bf16.msra.mxu0 %v1338
  %1364 = vmatprep.subr.bf16.mxu0 0
  %1365 = vmatpush1.bf16.msra.mxu0 %v1339
  %1366 = vmatprep.subr.bf16.mxu0 0
  %1367 = vmatpush1.bf16.msra.mxu0 %v1360
  %1368 = vmatprep.subr.bf16.mxu0 0
  %1369 = vmatpush1.bf16.msra.mxu0 0
  %1370 = vmatprep.subr.bf16.mxu0 0
  %1371 = vmatpush1.bf16.msra.mxu0 0
  %1372 = vmatprep.subr.bf16.mxu0 0
  %1373 = vmatpush1.bf16.msra.mxu0 0
  %1374 = vmatprep.subr.bf16.mxu0 0
  %1375 = vmatpush1.bf16.msra.mxu0 0
  %1376 = vmatprep.subr.bf16.mxu0 0
  %1377 = vmatpush1.bf16.msra.mxu0 0
  %1378 = vmatprep.subr.bf16.mxu0 0
  %1379 = vmatpush1.bf16.msra.mxu0 0
  %1380 = vmatprep.subr.bf16.mxu0 0
  %1381 = vmatpush1.bf16.msra.mxu0 0
  %1382 = vmatprep.subr.bf16.mxu0 0
  %1383 = vmatpush1.bf16.msra.mxu0 0
  %1384 = vmatprep.subr.bf16.mxu0 0
  %1385 = vmatpush1.bf16.msra.mxu0 0
  %1386 = vmatprep.subr.bf16.mxu0 0
  %1387 = vmatpush1.bf16.msra.mxu0 0
  %1388 = vmatprep.subr.bf16.mxu0 0
  %1389 = vmatpush1.bf16.msra.mxu0 0
  %1390 = vmatprep.subr.bf16.mxu0 0
  %1391 = vmatpush1.bf16.msra.mxu0 0
  %1392 = vmatprep.subr.bf16.mxu0 0
  %1393 = vmatpush1.bf16.msra.mxu0 0
  %1394 = vmatprep.mubr.bf16.mxu0 0
  %1395 = vmatmul.mubr.bf16.gmra.mrb[0].mxu0 %v1345
  %v1396 = vpop.f32.mrb[0].mxu0
  %v1397 = vadd.f32 0.0, %v1396
  %v1398 = vpop.f32.mrb[0].mxu0
  %v1399 = vpop.f32.mrb[0].mxu0
  %v1400 = vadd.f32 0.0, %v1399
  %v1401 = vpop.f32.mrb[0].mxu0
  %1402 = vmatprep.mubr.bf16.mxu0 0
  %1403 = vmatmul.mubr.bf16.gmra.mrb[0].mxu0 %v1348
  %v1404 = vpop.f32.mrb[0].mxu0
  %v1405 = vadd.f32 0.0, %v1404
  %v1406 = vpop.f32.mrb[0].mxu0
  %v1407 = vpop.f32.mrb[0].mxu0
  %v1408 = vadd.f32 0.0, %v1407
  %v1409 = vpop.f32.mrb[0].mxu0
  %1410 = vmatprep.mubr.bf16.mxu0 0
  %1411 = vmatmul.mubr.bf16.gmra.mrb[0].mxu0 %v1351
  %v1412 = vpop.f32.mrb[0].mxu0
  %v1413 = vadd.f32 0.0, %v1412
  %v1414 = vpop.f32.mrb[0].mxu0
  %v1415 = vpop.f32.mrb[0].mxu0
  %v1416 = vadd.f32 0.0, %v1415
  %v1417 = vpop.f32.mrb[0].mxu0
  %1418 = vmatprep.mubr.bf16.mxu0 0
  %1419 = vmatmul.mubr.bf16.gmra.mrb[0].mxu0 %v1354
  %v1420 = vpop.f32.mrb[0].mxu0
  %v1421 = vadd.f32 0.0, %v1420
  %v1422 = vpop.f32.mrb[0].mxu0
  %v1423 = vpop.f32.mrb[0].mxu0
  %v1424 = vadd.f32 0.0, %v1423
  %v1425 = vpop.f32.mrb[0].mxu0
  %1426 = vdwg.mxu0
  %v1427 = vpack.c.bf16 %v1400, %v1397
  %v1428 = vpack.c.bf16 %v1408, %v1405
  %v1429 = vpack.c.bf16 %v1416, %v1413
  %v1430 = vpack.c.bf16 %v1424, %v1421
  %v1431 = vld [vmem:[%s14] sm:$0x1]
  %v1433 = vpack.i.b16 %v1431, %v1431
  %v1435 = vlaneseq
  %v1436 = vshrl.u32 %v1435, 7
  %v1437 = vsub.s32 0, %v1436
  %v1438 = vrot.slane %v1433, %v1437
  %v1439 = vadd.bf16 %v1427, %v1438
  %v1440 = vadd.bf16 %v1428, %v1438
  %v1441 = vadd.bf16 %v1429, %v1438
  %v1442 = vadd.bf16 %v1430, %v1438
  %v1443 = vmax.bf16 %v1439, 0
  %v1444 = vmax.bf16 %v1440, 0
  %v1445 = vmax.bf16 %v1441, 0
  %v1446 = vmax.bf16 %v1442, 0
  %v1447 = vld [vmem:[%s15] sm:$0xf]
  %v1448 = vld [vmem:[%s15 + $0x4] sm:$0xf]
  %v1449 = vld [vmem:[%s15 + $0x8] sm:$0xf]
  %v1450 = vld [vmem:[%s15 + $0xc] sm:$0x7]
  %v1451 = vld [vmem:[%s16] sm:$0x1]
  %v1453 = vlaneseq
  %v1454 = vshrl.u32 %v1453, 7
  %v1455 = vsub.s32 0, %v1454
  %v1456 = vrot.slane %v1451, %v1455
  %v1462 = vunpack.c.l.b16 %v1447
  %v1463 = vunpack.c.l.b16 %v1448
  %v1464 = vunpack.c.l.b16 %v1449
  %v1465 = vunpack.c.l.b16 %v1450
  %v1466 = vpack.c.b16 %v1463, %v1462
  %v1467 = vpack.c.b16 %v1465, %v1464
  %vm1469 = vcmask 244736
  %v1471 = vsel %vm1469, %v1443, 0
  %v1474 = vsel %vm1469, %v1444, 0
  %v1477 = vsel %vm1469, %v1445, 0
  %v1480 = vsel %vm1469, %v1446, 0
  %v1483 = vsel %vm1356, %v1467, 0
  %1485 = vmatprep.subr.bf16.mxu0 0
  %1486 = vmatpush1.bf16.msra.mxu0 %v1466
  %1487 = vmatprep.subr.bf16.mxu0 0
  %1488 = vmatpush1.bf16.msra.mxu0 %v1483
  %1489 = vmatprep.subr.bf16.mxu0 0
  %1490 = vmatpush1.bf16.msra.mxu0 0
  %1491 = vmatprep.subr.bf16.mxu0 0
  %1492 = vmatpush1.bf16.msra.mxu0 0
  %1493 = vmatprep.subr.bf16.mxu0 0
  %1494 = vmatpush1.bf16.msra.mxu0 0
  %1495 = vmatprep.subr.bf16.mxu0 0
  %1496 = vmatpush1.bf16.msra.mxu0 0
  %1497 = vmatprep.subr.bf16.mxu0 0
  %1498 = vmatpush1.bf16.msra.mxu0 0
  %1499 = vmatprep.subr.bf16.mxu0 0
  %1500 = vmatpush1.bf16.msra.mxu0 0
  %1501 = vmatprep.subr.bf16.mxu0 0
  %1502 = vmatpush1.bf16.msra.mxu0 0
  %1503 = vmatprep.subr.bf16.mxu0 0
  %1504 = vmatpush1.bf16.msra.mxu0 0
  %1505 = vmatprep.subr.bf16.mxu0 0
  %1506 = vmatpush1.bf16.msra.mxu0 0
  %1507 = vmatprep.subr.bf16.mxu0 0
  %1508 = vmatpush1.bf16.msra.mxu0 0
  %1509 = vmatprep.subr.bf16.mxu0 0
  %1510 = vmatpush1.bf16.msra.mxu0 0
  %1511 = vmatprep.subr.bf16.mxu0 0
  %1512 = vmatpush1.bf16.msra.mxu0 0
  %1513 = vmatprep.subr.bf16.mxu0 0
  %1514 = vmatpush1.bf16.msra.mxu0 0
  %1515 = vmatprep.subr.bf16.mxu0 0
  %1516 = vmatpush1.bf16.msra.mxu0 0
  %1517 = vmatprep.mubr.bf16.mxu0 0
  %1518 = vmatmul.mubr.bf16.gmra.mrb[0].mxu0 %v1471
  %v1519 = vpop.f32.mrb[0].mxu0
  %v1520 = vadd.f32 %v1456, %v1519
  %v1521 = vpop.f32.mrb[0].mxu0
  %v1522 = vpop.f32.mrb[0].mxu0
  %v1523 = vadd.f32 %v1456, %v1522
  %v1524 = vpop.f32.mrb[0].mxu0
  %1525 = vmatprep.mubr.bf16.mxu0 0
  %1526 = vmatmul.mubr.bf16.gmra.mrb[0].mxu0 %v1474
  %v1527 = vpop.f32.mrb[0].mxu0
  %v1528 = vadd.f32 %v1456, %v1527
  %v1529 = vpop.f32.mrb[0].mxu0
  %v1530 = vpop.f32.mrb[0].mxu0
  %v1531 = vadd.f32 %v1456, %v1530
  %v1532 = vpop.f32.mrb[0].mxu0
  %1533 = vmatprep.mubr.bf16.mxu0 0
  %1534 = vmatmul.mubr.bf16.gmra.mrb[0].mxu0 %v1477
  %v1535 = vpop.f32.mrb[0].mxu0
  %v1536 = vadd.f32 %v1456, %v1535
  %v1537 = vpop.f32.mrb[0].mxu0
  %v1538 = vpop.f32.mrb[0].mxu0
  %v1539 = vadd.f32 %v1456, %v1538
  %v1540 = vpop.f32.mrb[0].mxu0
  %1541 = vmatprep.mubr.bf16.mxu0 0
  %1542 = vmatmul.mubr.bf16.gmra.mrb[0].mxu0 %v1480
  %v1543 = vpop.f32.mrb[0].mxu0
  %v1544 = vadd.f32 %v1456, %v1543
  %v1545 = vpop.f32.mrb[0].mxu0
  %v1546 = vpop.f32.mrb[0].mxu0
  %v1547 = vadd.f32 %v1456, %v1546
  %v1548 = vpop.f32.mrb[0].mxu0
  %1549 = vdwg.mxu0
  %v1550 = vmax.f32 %v1520, 0.0
  %v1551 = vmax.f32 %v1523, 0.0
  %v1552 = vmax.f32 %v1528, 0.0
  %v1553 = vmax.f32 %v1531, 0.0
  %v1554 = vmax.f32 %v1536, 0.0
  %v1555 = vmax.f32 %v1539, 0.0
  %v1556 = vmax.f32 %v1544, 0.0
  %v1557 = vmax.f32 %v1547, 0.0
  %v1558 = vld [vmem:[%s17] sm:$0x1]
  %v1560 = vlaneseq
  %v1561 = vshrl.u32 %v1560, 7
  %v1562 = vsub.s32 0, %v1561
  %v1563 = vrot.slane %v1558, %v1562
  %v1565 = vmul.f32 %v1550, %v1563
  %v1566 = vmul.f32 %v1551, %v1563
  %v1567 = vmul.f32 %v1552, %v1563
  %v1568 = vmul.f32 %v1553, %v1563
  %v1569 = vmul.f32 %v1554, %v1563
  %v1570 = vmul.f32 %v1555, %v1563
  %v1571 = vmul.f32 %v1556, %v1563
  %v1572 = vmul.f32 %v1557, %v1563
  %v1573 = vld [vmem:[%s18] sm:$0x1]
  %v1575 = vlaneseq
  %v1576 = vshrl.u32 %v1575, 7
  %v1577 = vsub.s32 0, %v1576
  %v1578 = vrot.slane %v1573, %v1577
  %v1580 = vadd.f32 %v1565, %v1578
  %v1581 = vadd.f32 %v1566, %v1578
  %v1582 = vadd.f32 %v1567, %v1578
  %v1583 = vadd.f32 %v1568, %v1578
  %v1584 = vadd.f32 %v1569, %v1578
  %v1585 = vadd.f32 %v1570, %v1578
  %v1586 = vadd.f32 %v1571, %v1578
  %v1587 = vadd.f32 %v1572, %v1578
  %vm1588 = vcmask 23552
  %1589 = vst.msk [vmem:[%s19] sm:$0xff] %vm1588, %v1580
  %1590 = vst.msk [vmem:[%s19 + $0x8] sm:$0xff] %vm1588, %v1581
  %1591 = vst.msk [vmem:[%s19 + $0x10] sm:$0xff] %vm1588, %v1582
  %1592 = vst.msk [vmem:[%s19 + $0x18] sm:$0xff] %vm1588, %v1583
  %1593 = vst.msk [vmem:[%s19 + $0x20] sm:$0xff] %vm1588, %v1584
  %1594 = vst.msk [vmem:[%s19 + $0x28] sm:$0xff] %vm1588, %v1585
  %1595 = vst.msk [vmem:[%s19 + $0x30] sm:$0xff] %vm1588, %v1586
  %1596 = vst.msk [vmem:[%s19 + $0x38] sm:$0xff] %vm1588, %v1587
  // Predicated region
  $region78: #{mlp8_forward.1} parent=0 // pred_check
    _
  $region79: #{mlp8_forward.1} parent=0 // pred_check_branch
    %1598 = sbr.rel (0) target = $region81
  $region80: #{mlp8_forward.1} parent=0 // pred_region
    _
  $region81: #{mlp8_forward.1} parent=0 // pred_fallthru
    _
  // Predicated region
  $region82: #{mlp8_forward.1} parent=0 // pred_check
    _
  $region83: #{mlp8_forward.1} parent=0 // pred_check_branch
    %1600 = sbr.rel (0) target = $region85
  $region84: #{mlp8_forward.1} parent=0 // pred_region
    _
  $region85: #{mlp8_forward.1} parent=0 // pred_fallthru
    _

</llo_original>
